<compile_context>
chip_gen: v7x
topology: tpu7x:2x2x1
jax: 0.10.0
libtpu: 0.0.40
codegen_flags: <defaults>
</compile_context>

<pallas_src>
import jax
import jax.numpy as jnp
from jax import lax
from jax.experimental import pallas as pl
from jax.experimental.pallas import tpu as pltpu


def gru_recurrence_kernel(gi_ref, whh_ref, bhh_ref, h_out_ref):
    """Single-shot GRU recurrence.

    gi_ref   : (T, Bp, 3H) f32 -- precomputed x_t @ W_ih^T + b_ih, gate order [r|z|n]
    whh_ref  : (H, 3H)     f32 -- W_hh^T
    bhh_ref  : (1, 3H)     f32
    h_out_ref: (Bp, H)     f32 -- final hidden state h_T
    """
    T, Bp, three_h = gi_ref.shape
    H = whh_ref.shape[0]

    # Hoisted out of the time loop: weights, bias broadcast (JAX does not CSE
    # broadcast_in_dim across loop iterations).
    whh = whh_ref[...]                                        # (H, 3H)
    bhh = jnp.broadcast_to(bhh_ref[...], (Bp, three_h))       # (Bp, 3H)

    def step(t, h):
        gi = gi_ref[t]                                        # (Bp, 3H)
        # Only the h-side matmul is on the sequential critical path.
        gh = jnp.dot(h, whh, preferred_element_type=jnp.float32) + bhh
        i_r, i_z, i_n = gi[:, :H], gi[:, H:2 * H], gi[:, 2 * H:]
        h_r, h_z, h_n = gh[:, :H], gh[:, H:2 * H], gh[:, 2 * H:]
        r = jax.nn.sigmoid(i_r + h_r)
        z = jax.nn.sigmoid(i_z + h_z)
        n = jnp.tanh(i_n + r * h_n)
        return n + z * (h - n)                                # == (1-z)*n + z*h

    h0 = jnp.zeros((Bp, H), jnp.float32)
    h_last = lax.fori_loop(0, T, step, h0, unroll=True)       # T is small & static
    h_out_ref[...] = h_last.astype(h_out_ref.dtype)


def char_model_forward(x_ids, emb_table, w_ih, w_hh, b_ih, b_hh):
    """Pallas implementation of CharModel.forward: returns h_n of shape (1, B, H)."""
    B, T = x_ids.shape
    H = w_hh.shape[0] // 3

    # ---- one-shot glue (outside the sequential path) ----
    # Fuse embedding + input projection: (V, E) @ (E, 3H) + b_ih, then gather rows
    # per token.  This hoists the x-side matmul out of the recurrence entirely.
    gi_table = emb_table @ w_ih.T + b_ih                      # (V, 3H)
    gi = jnp.take(gi_table, x_ids, axis=0)                    # (B, T, 3H)
    gi = jnp.swapaxes(gi, 0, 1)                               # (T, B, 3H) time-major

    # Pad batch to the f32 sublane count (8) so vregs / MXU rows are filled and the
    # output store is unmasked.  Padded rows are sliced off after the kernel.
    Bp = ((B + 7) // 8) * 8
    if Bp != B:
        gi = jnp.pad(gi, ((0, 0), (0, Bp - B), (0, 0)))

    whh_t = w_hh.T                                            # (H, 3H)
    bhh2 = b_hh.reshape(1, 3 * H)

    # Single invocation, everything resident in VMEM (~0.3 MiB total).
    h_last = pl.pallas_call(
        gru_recurrence_kernel,
        out_shape=jax.ShapeDtypeStruct((Bp, H), jnp.float32),
        in_specs=[
            pl.BlockSpec(memory_space=pltpu.MemorySpace.VMEM),   # gi (T, Bp, 3H)
            pl.BlockSpec(memory_space=pltpu.MemorySpace.VMEM),   # W_hh^T
            pl.BlockSpec(memory_space=pltpu.MemorySpace.VMEM),   # b_hh
        ],
        out_specs=pl.BlockSpec(memory_space=pltpu.MemorySpace.VMEM),
    )(gi, whh_t, bhh2)

    return h_last[:B][None, :, :]                             # (1, B, H)


def _reference_forward(x_ids, emb_table, w_ih, w_hh, b_ih, b_hh):
    """Pure-JAX reference (same math as torch.nn.GRU) for correctness check."""
    B, T = x_ids.shape
    H = w_hh.shape[0] // 3
    embed = jnp.take(emb_table, x_ids, axis=0)

    def step(h, x_t):
        gi = x_t @ w_ih.T + b_ih
        gh = h @ w_hh.T + b_hh
        i_r, i_z, i_n = gi[:, :H], gi[:, H:2 * H], gi[:, 2 * H:]
        h_r, h_z, h_n = gh[:, :H], gh[:, H:2 * H], gh[:, 2 * H:]
        r = jax.nn.sigmoid(i_r + h_r)
        z = jax.nn.sigmoid(i_z + h_z)
        n = jnp.tanh(i_n + r * h_n)
        h_new = (1.0 - z) * n + z * h
        return h_new, None

    h0 = jnp.zeros((B, H), jnp.float32)
    h_last, _ = jax.lax.scan(step, h0, jnp.swapaxes(embed, 0, 1))
    return h_last[None, :, :]


if __name__ == "__main__":
    # Small shapes consistent with the module's forward.
    char_vocab_len = 40
    emb_size = 128       # module default
    hidden_size = 128    # module default
    B, T = 2, 8

    key = jax.random.PRNGKey(0)
    k_ids, k_emb, k_wih, k_whh, k_bih, k_bhh = jax.random.split(key, 6)

    x_ids = jax.random.randint(k_ids, (B, T), 0, char_vocab_len, dtype=jnp.int32)

    # Deterministic parameter init (shapes match nn.Embedding / nn.GRU).
    emb_table = jax.random.normal(k_emb, (char_vocab_len, emb_size), jnp.float32)
    bound = 1.0 / (hidden_size ** 0.5)
    w_ih = jax.random.uniform(k_wih, (3 * hidden_size, emb_size), jnp.float32, -bound, bound)
    w_hh = jax.random.uniform(k_whh, (3 * hidden_size, hidden_size), jnp.float32, -bound, bound)
    b_ih = jax.random.uniform(k_bih, (3 * hidden_size,), jnp.float32, -bound, bound)
    b_hh = jax.random.uniform(k_bhh, (3 * hidden_size,), jnp.float32, -bound, bound)

    forward = jax.jit(char_model_forward)
    out = forward(x_ids, emb_table, w_ih, w_hh, b_ih, b_hh)
    out = jax.block_until_ready(out)

    ref = _reference_forward(x_ids, emb_table, w_ih, w_hh, b_ih, b_hh)
    assert out.shape == (1, B, hidden_size), out.shape
    assert jnp.allclose(out, ref, rtol=1e-4, atol=1e-4), "mismatch vs JAX reference"

    print("KERNEL_OK")
</pallas_src>

<mosaic_0001>
module attributes {stable_mosaic.version = 11 : i64} {
  func.func @gru_recurrence_kernel(%arg0: memref<8x8x384xf32, #tpu.memory_space<vmem>>, %arg1: memref<128x384xf32, #tpu.memory_space<vmem>>, %arg2: memref<1x384xf32, #tpu.memory_space<vmem>>, %arg3: memref<8x128xf32, #tpu.memory_space<vmem>>) attributes {dimension_semantics = [], scalar_prefetch = 0 : i64, scratch_operands = 0 : i64, tpu.core_type = #tpu.core_type<tc>} {
    %c0 = arith.constant 0 : index
    %c0_0 = arith.constant 0 : index
    %0 = vector.load %arg1[%c0, %c0_0] : memref<128x384xf32, #tpu.memory_space<vmem>>, vector<128x384xf32>
    %c0_1 = arith.constant 0 : index
    %c0_2 = arith.constant 0 : index
    %1 = vector.load %arg2[%c0_1, %c0_2] : memref<1x384xf32, #tpu.memory_space<vmem>>, vector<1x384xf32>
    %2 = vector.shape_cast %1 : vector<1x384xf32> to vector<1x384xf32>
    %3 = vector.broadcast %2 : vector<1x384xf32> to vector<8x384xf32>
    %cst = arith.constant 0.000000e+00 : f32
    %4 = vector.broadcast %cst : f32 to vector<8x128xf32>
    %c0_i32 = arith.constant 0 : i32
    %5 = arith.index_cast %c0_i32 : i32 to index
    %c0_3 = arith.constant 0 : index
    %c0_4 = arith.constant 0 : index
    %6 = vector.load %arg0[%5, %c0_3, %c0_4] : memref<8x8x384xf32, #tpu.memory_space<vmem>>, vector<1x8x384xf32>
    %7 = vector.shape_cast %6 : vector<1x8x384xf32> to vector<8x384xf32>
    %cst_5 = arith.constant dense<0.000000e+00> : vector<8x384xf32>
    %8 = tpu.matmul %4, %0, %cst_5 {dimension_numbers = #tpu.dot_dimension_numbers<[1], [0], [0], [1], [0, 0, 1, 1], [], []>} : vector<8x128xf32>, vector<128x384xf32>, vector<8x384xf32> -> vector<8x384xf32>
    %9 = arith.addf %8, %3 : vector<8x384xf32>
    %10 = vector.extract_strided_slice %7 {offsets = [0, 0], sizes = [8, 128], strides = [1, 1]} : vector<8x384xf32> to vector<8x128xf32>
    %11 = vector.extract_strided_slice %7 {offsets = [0, 128], sizes = [8, 128], strides = [1, 1]} : vector<8x384xf32> to vector<8x128xf32>
    %12 = vector.extract_strided_slice %7 {offsets = [0, 256], sizes = [8, 128], strides = [1, 1]} : vector<8x384xf32> to vector<8x128xf32>
    %13 = vector.extract_strided_slice %9 {offsets = [0, 0], sizes = [8, 128], strides = [1, 1]} : vector<8x384xf32> to vector<8x128xf32>
    %14 = vector.extract_strided_slice %9 {offsets = [0, 128], sizes = [8, 128], strides = [1, 1]} : vector<8x384xf32> to vector<8x128xf32>
    %15 = vector.extract_strided_slice %9 {offsets = [0, 256], sizes = [8, 128], strides = [1, 1]} : vector<8x384xf32> to vector<8x128xf32>
    %16 = arith.addf %10, %13 : vector<8x128xf32>
    %17 = arith.negf %16 : vector<8x128xf32>
    %18 = math.exp %17 : vector<8x128xf32>
    %cst_6 = arith.constant 1.000000e+00 : f32
    %19 = vector.broadcast %cst_6 : f32 to vector<8x128xf32>
    %20 = arith.addf %19, %18 : vector<8x128xf32>
    %21 = arith.divf %19, %20 : vector<8x128xf32>
    %22 = arith.addf %11, %14 : vector<8x128xf32>
    %23 = arith.negf %22 : vector<8x128xf32>
    %24 = math.exp %23 : vector<8x128xf32>
    %cst_7 = arith.constant 1.000000e+00 : f32
    %25 = vector.broadcast %cst_7 : f32 to vector<8x128xf32>
    %26 = arith.addf %25, %24 : vector<8x128xf32>
    %27 = arith.divf %25, %26 : vector<8x128xf32>
    %28 = arith.mulf %21, %15 : vector<8x128xf32>
    %29 = arith.addf %12, %28 : vector<8x128xf32>
    %30 = math.tanh %29 : vector<8x128xf32>
    %31 = arith.subf %4, %30 : vector<8x128xf32>
    %32 = arith.mulf %27, %31 : vector<8x128xf32>
    %33 = arith.addf %30, %32 : vector<8x128xf32>
    %c1_i32 = arith.constant 1 : i32
    %34 = arith.index_cast %c1_i32 : i32 to index
    %c0_8 = arith.constant 0 : index
    %c0_9 = arith.constant 0 : index
    %35 = vector.load %arg0[%34, %c0_8, %c0_9] : memref<8x8x384xf32, #tpu.memory_space<vmem>>, vector<1x8x384xf32>
    %36 = vector.shape_cast %35 : vector<1x8x384xf32> to vector<8x384xf32>
    %cst_10 = arith.constant dense<0.000000e+00> : vector<8x384xf32>
    %37 = tpu.matmul %33, %0, %cst_10 {dimension_numbers = #tpu.dot_dimension_numbers<[1], [0], [0], [1], [0, 0, 1, 1], [], []>} : vector<8x128xf32>, vector<128x384xf32>, vector<8x384xf32> -> vector<8x384xf32>
    %38 = arith.addf %37, %3 : vector<8x384xf32>
    %39 = vector.extract_strided_slice %36 {offsets = [0, 0], sizes = [8, 128], strides = [1, 1]} : vector<8x384xf32> to vector<8x128xf32>
    %40 = vector.extract_strided_slice %36 {offsets = [0, 128], sizes = [8, 128], strides = [1, 1]} : vector<8x384xf32> to vector<8x128xf32>
    %41 = vector.extract_strided_slice %36 {offsets = [0, 256], sizes = [8, 128], strides = [1, 1]} : vector<8x384xf32> to vector<8x128xf32>
    %42 = vector.extract_strided_slice %38 {offsets = [0, 0], sizes = [8, 128], strides = [1, 1]} : vector<8x384xf32> to vector<8x128xf32>
    %43 = vector.extract_strided_slice %38 {offsets = [0, 128], sizes = [8, 128], strides = [1, 1]} : vector<8x384xf32> to vector<8x128xf32>
    %44 = vector.extract_strided_slice %38 {offsets = [0, 256], sizes = [8, 128], strides = [1, 1]} : vector<8x384xf32> to vector<8x128xf32>
    %45 = arith.addf %39, %42 : vector<8x128xf32>
    %46 = arith.negf %45 : vector<8x128xf32>
    %47 = math.exp %46 : vector<8x128xf32>
    %cst_11 = arith.constant 1.000000e+00 : f32
    %48 = vector.broadcast %cst_11 : f32 to vector<8x128xf32>
    %49 = arith.addf %48, %47 : vector<8x128xf32>
    %50 = arith.divf %48, %49 : vector<8x128xf32>
    %51 = arith.addf %40, %43 : vector<8x128xf32>
    %52 = arith.negf %51 : vector<8x128xf32>
    %53 = math.exp %52 : vector<8x128xf32>
    %cst_12 = arith.constant 1.000000e+00 : f32
    %54 = vector.broadcast %cst_12 : f32 to vector<8x128xf32>
    %55 = arith.addf %54, %53 : vector<8x128xf32>
    %56 = arith.divf %54, %55 : vector<8x128xf32>
    %57 = arith.mulf %50, %44 : vector<8x128xf32>
    %58 = arith.addf %41, %57 : vector<8x128xf32>
    %59 = math.tanh %58 : vector<8x128xf32>
    %60 = arith.subf %33, %59 : vector<8x128xf32>
    %61 = arith.mulf %56, %60 : vector<8x128xf32>
    %62 = arith.addf %59, %61 : vector<8x128xf32>
    %c2_i32 = arith.constant 2 : i32
    %63 = arith.index_cast %c2_i32 : i32 to index
    %c0_13 = arith.constant 0 : index
    %c0_14 = arith.constant 0 : index
    %64 = vector.load %arg0[%63, %c0_13, %c0_14] : memref<8x8x384xf32, #tpu.memory_space<vmem>>, vector<1x8x384xf32>
    %65 = vector.shape_cast %64 : vector<1x8x384xf32> to vector<8x384xf32>
    %cst_15 = arith.constant dense<0.000000e+00> : vector<8x384xf32>
    %66 = tpu.matmul %62, %0, %cst_15 {dimension_numbers = #tpu.dot_dimension_numbers<[1], [0], [0], [1], [0, 0, 1, 1], [], []>} : vector<8x128xf32>, vector<128x384xf32>, vector<8x384xf32> -> vector<8x384xf32>
    %67 = arith.addf %66, %3 : vector<8x384xf32>
    %68 = vector.extract_strided_slice %65 {offsets = [0, 0], sizes = [8, 128], strides = [1, 1]} : vector<8x384xf32> to vector<8x128xf32>
    %69 = vector.extract_strided_slice %65 {offsets = [0, 128], sizes = [8, 128], strides = [1, 1]} : vector<8x384xf32> to vector<8x128xf32>
    %70 = vector.extract_strided_slice %65 {offsets = [0, 256], sizes = [8, 128], strides = [1, 1]} : vector<8x384xf32> to vector<8x128xf32>
    %71 = vector.extract_strided_slice %67 {offsets = [0, 0], sizes = [8, 128], strides = [1, 1]} : vector<8x384xf32> to vector<8x128xf32>
    %72 = vector.extract_strided_slice %67 {offsets = [0, 128], sizes = [8, 128], strides = [1, 1]} : vector<8x384xf32> to vector<8x128xf32>
    %73 = vector.extract_strided_slice %67 {offsets = [0, 256], sizes = [8, 128], strides = [1, 1]} : vector<8x384xf32> to vector<8x128xf32>
    %74 = arith.addf %68, %71 : vector<8x128xf32>
    %75 = arith.negf %74 : vector<8x128xf32>
    %76 = math.exp %75 : vector<8x128xf32>
    %cst_16 = arith.constant 1.000000e+00 : f32
    %77 = vector.broadcast %cst_16 : f32 to vector<8x128xf32>
    %78 = arith.addf %77, %76 : vector<8x128xf32>
    %79 = arith.divf %77, %78 : vector<8x128xf32>
    %80 = arith.addf %69, %72 : vector<8x128xf32>
    %81 = arith.negf %80 : vector<8x128xf32>
    %82 = math.exp %81 : vector<8x128xf32>
    %cst_17 = arith.constant 1.000000e+00 : f32
    %83 = vector.broadcast %cst_17 : f32 to vector<8x128xf32>
    %84 = arith.addf %83, %82 : vector<8x128xf32>
    %85 = arith.divf %83, %84 : vector<8x128xf32>
    %86 = arith.mulf %79, %73 : vector<8x128xf32>
    %87 = arith.addf %70, %86 : vector<8x128xf32>
    %88 = math.tanh %87 : vector<8x128xf32>
    %89 = arith.subf %62, %88 : vector<8x128xf32>
    %90 = arith.mulf %85, %89 : vector<8x128xf32>
    %91 = arith.addf %88, %90 : vector<8x128xf32>
    %c3_i32 = arith.constant 3 : i32
    %92 = arith.index_cast %c3_i32 : i32 to index
    %c0_18 = arith.constant 0 : index
    %c0_19 = arith.constant 0 : index
    %93 = vector.load %arg0[%92, %c0_18, %c0_19] : memref<8x8x384xf32, #tpu.memory_space<vmem>>, vector<1x8x384xf32>
    %94 = vector.shape_cast %93 : vector<1x8x384xf32> to vector<8x384xf32>
    %cst_20 = arith.constant dense<0.000000e+00> : vector<8x384xf32>
    %95 = tpu.matmul %91, %0, %cst_20 {dimension_numbers = #tpu.dot_dimension_numbers<[1], [0], [0], [1], [0, 0, 1, 1], [], []>} : vector<8x128xf32>, vector<128x384xf32>, vector<8x384xf32> -> vector<8x384xf32>
    %96 = arith.addf %95, %3 : vector<8x384xf32>
    %97 = vector.extract_strided_slice %94 {offsets = [0, 0], sizes = [8, 128], strides = [1, 1]} : vector<8x384xf32> to vector<8x128xf32>
    %98 = vector.extract_strided_slice %94 {offsets = [0, 128], sizes = [8, 128], strides = [1, 1]} : vector<8x384xf32> to vector<8x128xf32>
    %99 = vector.extract_strided_slice %94 {offsets = [0, 256], sizes = [8, 128], strides = [1, 1]} : vector<8x384xf32> to vector<8x128xf32>
    %100 = vector.extract_strided_slice %96 {offsets = [0, 0], sizes = [8, 128], strides = [1, 1]} : vector<8x384xf32> to vector<8x128xf32>
    %101 = vector.extract_strided_slice %96 {offsets = [0, 128], sizes = [8, 128], strides = [1, 1]} : vector<8x384xf32> to vector<8x128xf32>
    %102 = vector.extract_strided_slice %96 {offsets = [0, 256], sizes = [8, 128], strides = [1, 1]} : vector<8x384xf32> to vector<8x128xf32>
    %103 = arith.addf %97, %100 : vector<8x128xf32>
    %104 = arith.negf %103 : vector<8x128xf32>
    %105 = math.exp %104 : vector<8x128xf32>
    %cst_21 = arith.constant 1.000000e+00 : f32
    %106 = vector.broadcast %cst_21 : f32 to vector<8x128xf32>
    %107 = arith.addf %106, %105 : vector<8x128xf32>
    %108 = arith.divf %106, %107 : vector<8x128xf32>
    %109 = arith.addf %98, %101 : vector<8x128xf32>
    %110 = arith.negf %109 : vector<8x128xf32>
    %111 = math.exp %110 : vector<8x128xf32>
    %cst_22 = arith.constant 1.000000e+00 : f32
    %112 = vector.broadcast %cst_22 : f32 to vector<8x128xf32>
    %113 = arith.addf %112, %111 : vector<8x128xf32>
    %114 = arith.divf %112, %113 : vector<8x128xf32>
    %115 = arith.mulf %108, %102 : vector<8x128xf32>
    %116 = arith.addf %99, %115 : vector<8x128xf32>
    %117 = math.tanh %116 : vector<8x128xf32>
    %118 = arith.subf %91, %117 : vector<8x128xf32>
    %119 = arith.mulf %114, %118 : vector<8x128xf32>
    %120 = arith.addf %117, %119 : vector<8x128xf32>
    %c4_i32 = arith.constant 4 : i32
    %121 = arith.index_cast %c4_i32 : i32 to index
    %c0_23 = arith.constant 0 : index
    %c0_24 = arith.constant 0 : index
    %122 = vector.load %arg0[%121, %c0_23, %c0_24] : memref<8x8x384xf32, #tpu.memory_space<vmem>>, vector<1x8x384xf32>
    %123 = vector.shape_cast %122 : vector<1x8x384xf32> to vector<8x384xf32>
    %cst_25 = arith.constant dense<0.000000e+00> : vector<8x384xf32>
    %124 = tpu.matmul %120, %0, %cst_25 {dimension_numbers = #tpu.dot_dimension_numbers<[1], [0], [0], [1], [0, 0, 1, 1], [], []>} : vector<8x128xf32>, vector<128x384xf32>, vector<8x384xf32> -> vector<8x384xf32>
    %125 = arith.addf %124, %3 : vector<8x384xf32>
    %126 = vector.extract_strided_slice %123 {offsets = [0, 0], sizes = [8, 128], strides = [1, 1]} : vector<8x384xf32> to vector<8x128xf32>
    %127 = vector.extract_strided_slice %123 {offsets = [0, 128], sizes = [8, 128], strides = [1, 1]} : vector<8x384xf32> to vector<8x128xf32>
    %128 = vector.extract_strided_slice %123 {offsets = [0, 256], sizes = [8, 128], strides = [1, 1]} : vector<8x384xf32> to vector<8x128xf32>
    %129 = vector.extract_strided_slice %125 {offsets = [0, 0], sizes = [8, 128], strides = [1, 1]} : vector<8x384xf32> to vector<8x128xf32>
    %130 = vector.extract_strided_slice %125 {offsets = [0, 128], sizes = [8, 128], strides = [1, 1]} : vector<8x384xf32> to vector<8x128xf32>
    %131 = vector.extract_strided_slice %125 {offsets = [0, 256], sizes = [8, 128], strides = [1, 1]} : vector<8x384xf32> to vector<8x128xf32>
    %132 = arith.addf %126, %129 : vector<8x128xf32>
    %133 = arith.negf %132 : vector<8x128xf32>
    %134 = math.exp %133 : vector<8x128xf32>
    %cst_26 = arith.constant 1.000000e+00 : f32
    %135 = vector.broadcast %cst_26 : f32 to vector<8x128xf32>
    %136 = arith.addf %135, %134 : vector<8x128xf32>
    %137 = arith.divf %135, %136 : vector<8x128xf32>
    %138 = arith.addf %127, %130 : vector<8x128xf32>
    %139 = arith.negf %138 : vector<8x128xf32>
    %140 = math.exp %139 : vector<8x128xf32>
    %cst_27 = arith.constant 1.000000e+00 : f32
    %141 = vector.broadcast %cst_27 : f32 to vector<8x128xf32>
    %142 = arith.addf %141, %140 : vector<8x128xf32>
    %143 = arith.divf %141, %142 : vector<8x128xf32>
    %144 = arith.mulf %137, %131 : vector<8x128xf32>
    %145 = arith.addf %128, %144 : vector<8x128xf32>
    %146 = math.tanh %145 : vector<8x128xf32>
    %147 = arith.subf %120, %146 : vector<8x128xf32>
    %148 = arith.mulf %143, %147 : vector<8x128xf32>
    %149 = arith.addf %146, %148 : vector<8x128xf32>
    %c5_i32 = arith.constant 5 : i32
    %150 = arith.index_cast %c5_i32 : i32 to index
    %c0_28 = arith.constant 0 : index
    %c0_29 = arith.constant 0 : index
    %151 = vector.load %arg0[%150, %c0_28, %c0_29] : memref<8x8x384xf32, #tpu.memory_space<vmem>>, vector<1x8x384xf32>
    %152 = vector.shape_cast %151 : vector<1x8x384xf32> to vector<8x384xf32>
    %cst_30 = arith.constant dense<0.000000e+00> : vector<8x384xf32>
    %153 = tpu.matmul %149, %0, %cst_30 {dimension_numbers = #tpu.dot_dimension_numbers<[1], [0], [0], [1], [0, 0, 1, 1], [], []>} : vector<8x128xf32>, vector<128x384xf32>, vector<8x384xf32> -> vector<8x384xf32>
    %154 = arith.addf %153, %3 : vector<8x384xf32>
    %155 = vector.extract_strided_slice %152 {offsets = [0, 0], sizes = [8, 128], strides = [1, 1]} : vector<8x384xf32> to vector<8x128xf32>
    %156 = vector.extract_strided_slice %152 {offsets = [0, 128], sizes = [8, 128], strides = [1, 1]} : vector<8x384xf32> to vector<8x128xf32>
    %157 = vector.extract_strided_slice %152 {offsets = [0, 256], sizes = [8, 128], strides = [1, 1]} : vector<8x384xf32> to vector<8x128xf32>
    %158 = vector.extract_strided_slice %154 {offsets = [0, 0], sizes = [8, 128], strides = [1, 1]} : vector<8x384xf32> to vector<8x128xf32>
    %159 = vector.extract_strided_slice %154 {offsets = [0, 128], sizes = [8, 128], strides = [1, 1]} : vector<8x384xf32> to vector<8x128xf32>
    %160 = vector.extract_strided_slice %154 {offsets = [0, 256], sizes = [8, 128], strides = [1, 1]} : vector<8x384xf32> to vector<8x128xf32>
    %161 = arith.addf %155, %158 : vector<8x128xf32>
    %162 = arith.negf %161 : vector<8x128xf32>
    %163 = math.exp %162 : vector<8x128xf32>
    %cst_31 = arith.constant 1.000000e+00 : f32
    %164 = vector.broadcast %cst_31 : f32 to vector<8x128xf32>
    %165 = arith.addf %164, %163 : vector<8x128xf32>
    %166 = arith.divf %164, %165 : vector<8x128xf32>
    %167 = arith.addf %156, %159 : vector<8x128xf32>
    %168 = arith.negf %167 : vector<8x128xf32>
    %169 = math.exp %168 : vector<8x128xf32>
    %cst_32 = arith.constant 1.000000e+00 : f32
    %170 = vector.broadcast %cst_32 : f32 to vector<8x128xf32>
    %171 = arith.addf %170, %169 : vector<8x128xf32>
    %172 = arith.divf %170, %171 : vector<8x128xf32>
    %173 = arith.mulf %166, %160 : vector<8x128xf32>
    %174 = arith.addf %157, %173 : vector<8x128xf32>
    %175 = math.tanh %174 : vector<8x128xf32>
    %176 = arith.subf %149, %175 : vector<8x128xf32>
    %177 = arith.mulf %172, %176 : vector<8x128xf32>
    %178 = arith.addf %175, %177 : vector<8x128xf32>
    %c6_i32 = arith.constant 6 : i32
    %179 = arith.index_cast %c6_i32 : i32 to index
    %c0_33 = arith.constant 0 : index
    %c0_34 = arith.constant 0 : index
    %180 = vector.load %arg0[%179, %c0_33, %c0_34] : memref<8x8x384xf32, #tpu.memory_space<vmem>>, vector<1x8x384xf32>
    %181 = vector.shape_cast %180 : vector<1x8x384xf32> to vector<8x384xf32>
    %cst_35 = arith.constant dense<0.000000e+00> : vector<8x384xf32>
    %182 = tpu.matmul %178, %0, %cst_35 {dimension_numbers = #tpu.dot_dimension_numbers<[1], [0], [0], [1], [0, 0, 1, 1], [], []>} : vector<8x128xf32>, vector<128x384xf32>, vector<8x384xf32> -> vector<8x384xf32>
    %183 = arith.addf %182, %3 : vector<8x384xf32>
    %184 = vector.extract_strided_slice %181 {offsets = [0, 0], sizes = [8, 128], strides = [1, 1]} : vector<8x384xf32> to vector<8x128xf32>
    %185 = vector.extract_strided_slice %181 {offsets = [0, 128], sizes = [8, 128], strides = [1, 1]} : vector<8x384xf32> to vector<8x128xf32>
    %186 = vector.extract_strided_slice %181 {offsets = [0, 256], sizes = [8, 128], strides = [1, 1]} : vector<8x384xf32> to vector<8x128xf32>
    %187 = vector.extract_strided_slice %183 {offsets = [0, 0], sizes = [8, 128], strides = [1, 1]} : vector<8x384xf32> to vector<8x128xf32>
    %188 = vector.extract_strided_slice %183 {offsets = [0, 128], sizes = [8, 128], strides = [1, 1]} : vector<8x384xf32> to vector<8x128xf32>
    %189 = vector.extract_strided_slice %183 {offsets = [0, 256], sizes = [8, 128], strides = [1, 1]} : vector<8x384xf32> to vector<8x128xf32>
    %190 = arith.addf %184, %187 : vector<8x128xf32>
    %191 = arith.negf %190 : vector<8x128xf32>
    %192 = math.exp %191 : vector<8x128xf32>
    %cst_36 = arith.constant 1.000000e+00 : f32
    %193 = vector.broadcast %cst_36 : f32 to vector<8x128xf32>
    %194 = arith.addf %193, %192 : vector<8x128xf32>
    %195 = arith.divf %193, %194 : vector<8x128xf32>
    %196 = arith.addf %185, %188 : vector<8x128xf32>
    %197 = arith.negf %196 : vector<8x128xf32>
    %198 = math.exp %197 : vector<8x128xf32>
    %cst_37 = arith.constant 1.000000e+00 : f32
    %199 = vector.broadcast %cst_37 : f32 to vector<8x128xf32>
    %200 = arith.addf %199, %198 : vector<8x128xf32>
    %201 = arith.divf %199, %200 : vector<8x128xf32>
    %202 = arith.mulf %195, %189 : vector<8x128xf32>
    %203 = arith.addf %186, %202 : vector<8x128xf32>
    %204 = math.tanh %203 : vector<8x128xf32>
    %205 = arith.subf %178, %204 : vector<8x128xf32>
    %206 = arith.mulf %201, %205 : vector<8x128xf32>
    %207 = arith.addf %204, %206 : vector<8x128xf32>
    %c7_i32 = arith.constant 7 : i32
    %208 = arith.index_cast %c7_i32 : i32 to index
    %c0_38 = arith.constant 0 : index
    %c0_39 = arith.constant 0 : index
    %209 = vector.load %arg0[%208, %c0_38, %c0_39] : memref<8x8x384xf32, #tpu.memory_space<vmem>>, vector<1x8x384xf32>
    %210 = vector.shape_cast %209 : vector<1x8x384xf32> to vector<8x384xf32>
    %cst_40 = arith.constant dense<0.000000e+00> : vector<8x384xf32>
    %211 = tpu.matmul %207, %0, %cst_40 {dimension_numbers = #tpu.dot_dimension_numbers<[1], [0], [0], [1], [0, 0, 1, 1], [], []>} : vector<8x128xf32>, vector<128x384xf32>, vector<8x384xf32> -> vector<8x384xf32>
    %212 = arith.addf %211, %3 : vector<8x384xf32>
    %213 = vector.extract_strided_slice %210 {offsets = [0, 0], sizes = [8, 128], strides = [1, 1]} : vector<8x384xf32> to vector<8x128xf32>
    %214 = vector.extract_strided_slice %210 {offsets = [0, 128], sizes = [8, 128], strides = [1, 1]} : vector<8x384xf32> to vector<8x128xf32>
    %215 = vector.extract_strided_slice %210 {offsets = [0, 256], sizes = [8, 128], strides = [1, 1]} : vector<8x384xf32> to vector<8x128xf32>
    %216 = vector.extract_strided_slice %212 {offsets = [0, 0], sizes = [8, 128], strides = [1, 1]} : vector<8x384xf32> to vector<8x128xf32>
    %217 = vector.extract_strided_slice %212 {offsets = [0, 128], sizes = [8, 128], strides = [1, 1]} : vector<8x384xf32> to vector<8x128xf32>
    %218 = vector.extract_strided_slice %212 {offsets = [0, 256], sizes = [8, 128], strides = [1, 1]} : vector<8x384xf32> to vector<8x128xf32>
    %219 = arith.addf %213, %216 : vector<8x128xf32>
    %220 = arith.negf %219 : vector<8x128xf32>
    %221 = math.exp %220 : vector<8x128xf32>
    %cst_41 = arith.constant 1.000000e+00 : f32
    %222 = vector.broadcast %cst_41 : f32 to vector<8x128xf32>
    %223 = arith.addf %222, %221 : vector<8x128xf32>
    %224 = arith.divf %222, %223 : vector<8x128xf32>
    %225 = arith.addf %214, %217 : vector<8x128xf32>
    %226 = arith.negf %225 : vector<8x128xf32>
    %227 = math.exp %226 : vector<8x128xf32>
    %cst_42 = arith.constant 1.000000e+00 : f32
    %228 = vector.broadcast %cst_42 : f32 to vector<8x128xf32>
    %229 = arith.addf %228, %227 : vector<8x128xf32>
    %230 = arith.divf %228, %229 : vector<8x128xf32>
    %231 = arith.mulf %224, %218 : vector<8x128xf32>
    %232 = arith.addf %215, %231 : vector<8x128xf32>
    %233 = math.tanh %232 : vector<8x128xf32>
    %234 = arith.subf %207, %233 : vector<8x128xf32>
    %235 = arith.mulf %230, %234 : vector<8x128xf32>
    %236 = arith.addf %233, %235 : vector<8x128xf32>
    %c8_i32 = arith.constant 8 : i32
    %c0_43 = arith.constant 0 : index
    %c0_44 = arith.constant 0 : index
    %237 = vector.load %arg3[%c0_43, %c0_44] : memref<8x128xf32, #tpu.memory_space<vmem>>, vector<8x128xf32>
    tpu.vector_store %arg3[%c0_43, %c0_44], %236 {strides = array<i32>} : memref<8x128xf32, #tpu.memory_space<vmem>>, vector<8x128xf32>,
    return
  }
}

</mosaic_0001>

<llo_original>
// kernel: char_model_forward.1
$region0: #{char_model_forward.1}
  #allocation0 [shape = 'u32[]', space=smem, size = 0x4, offset = 0x4, fixed_abs, tag = 'smem constant byte address 0x4 - core index']
  #allocation1 [shape = 'u32[144,128]{1,0:T(1,128)}', space=vmem, size = 0x12000, scoped, tag = 'internal scratch']
  %s0 = inlined_call_operand.vmem [shape: f32[8,8,384], index: 0, kind: input, shape index: {}]
  %s1 = inlined_call_operand.vmem [shape: f32[128,384], index: 1, kind: input, shape index: {}]
  %s2 = inlined_call_operand.vmem [shape: f32[1,384], index: 2, kind: input, shape index: {}]
  %s3 = inlined_call_operand.vmem [shape: f32[8,128], index: 3, kind: output, shape index: {}]
  %s4 = sld [smem:[#allocation0]]
  $region22: #{char_model_forward.1} parent=0
    _
  %s6 = ssub.s32 1, %s4
  %s7 = scalar_select 0, %s6, %s4
  // Predicated region
  $region2: #{char_model_forward.1} parent=0 // pred_check
    _
  $region3: #{char_model_forward.1} parent=0 // pred_check_branch
    %9 = sbr.rel (0) target = $region5
  $region4: #{char_model_forward.1} parent=0 // pred_region
    _
  $region5: #{char_model_forward.1} parent=0 // pred_fallthru
    _
  // Predicated region
  $region6: #{char_model_forward.1} parent=0 // pred_check
    _
  $region7: #{char_model_forward.1} parent=0 // pred_check_branch
    %11 = sbr.rel (0) target = $region9
  $region8: #{char_model_forward.1} parent=0 // pred_region
    _
  $region9: #{char_model_forward.1} parent=0 // pred_fallthru
    _
  // Predicated region
  $region10: #{char_model_forward.1} parent=0 // pred_check
    _
  $region11: #{char_model_forward.1} parent=0 // pred_check_branch
    %13 = sbr.rel (0) target = $region13
  $region12: #{char_model_forward.1} parent=0 // pred_region
    _
  $region13: #{char_model_forward.1} parent=0 // pred_fallthru
    _
  %v14 = vld [vmem:[%s1] sm:$0xff]
  %v15 = vld [vmem:[%s1 + $0x8] sm:$0xff]
  %v16 = vld [vmem:[%s1 + $0x10] sm:$0xff]
  %v17 = vld [vmem:[%s1 + $0x18] sm:$0xff]
  %v18 = vld [vmem:[%s1 + $0x20] sm:$0xff]
  %v19 = vld [vmem:[%s1 + $0x28] sm:$0xff]
  %v20 = vld [vmem:[%s1 + $0x30] sm:$0xff]
  %v21 = vld [vmem:[%s1 + $0x38] sm:$0xff]
  %v22 = vld [vmem:[%s1 + $0x40] sm:$0xff]
  %v23 = vld [vmem:[%s1 + $0x48] sm:$0xff]
  %v24 = vld [vmem:[%s1 + $0x50] sm:$0xff]
  %v25 = vld [vmem:[%s1 + $0x58] sm:$0xff]
  %v26 = vld [vmem:[%s1 + $0x60] sm:$0xff]
  %v27 = vld [vmem:[%s1 + $0x68] sm:$0xff]
  %v28 = vld [vmem:[%s1 + $0x70] sm:$0xff]
  %v29 = vld [vmem:[%s1 + $0x78] sm:$0xff]
  %v30 = vld [vmem:[%s1 + $0x80] sm:$0xff]
  %v31 = vld [vmem:[%s1 + $0x88] sm:$0xff]
  %v32 = vld [vmem:[%s1 + $0x90] sm:$0xff]
  %v33 = vld [vmem:[%s1 + $0x98] sm:$0xff]
  %v34 = vld [vmem:[%s1 + $0xa0] sm:$0xff]
  %v35 = vld [vmem:[%s1 + $0xa8] sm:$0xff]
  %v36 = vld [vmem:[%s1 + $0xb0] sm:$0xff]
  %v37 = vld [vmem:[%s1 + $0xb8] sm:$0xff]
  %v38 = vld [vmem:[%s1 + $0xc0] sm:$0xff]
  %v39 = vld [vmem:[%s1 + $0xc8] sm:$0xff]
  %v40 = vld [vmem:[%s1 + $0xd0] sm:$0xff]
  %v41 = vld [vmem:[%s1 + $0xd8] sm:$0xff]
  %v42 = vld [vmem:[%s1 + $0xe0] sm:$0xff]
  %v43 = vld [vmem:[%s1 + $0xe8] sm:$0xff]
  %v44 = vld [vmem:[%s1 + $0xf0] sm:$0xff]
  %v45 = vld [vmem:[%s1 + $0xf8] sm:$0xff]
  %v46 = vld [vmem:[%s1 + $0x100] sm:$0xff]
  %v47 = vld [vmem:[%s1 + $0x108] sm:$0xff]
  %v48 = vld [vmem:[%s1 + $0x110] sm:$0xff]
  %v49 = vld [vmem:[%s1 + $0x118] sm:$0xff]
  %v50 = vld [vmem:[%s1 + $0x120] sm:$0xff]
  %v51 = vld [vmem:[%s1 + $0x128] sm:$0xff]
  %v52 = vld [vmem:[%s1 + $0x130] sm:$0xff]
  %v53 = vld [vmem:[%s1 + $0x138] sm:$0xff]
  %v54 = vld [vmem:[%s1 + $0x140] sm:$0xff]
  %v55 = vld [vmem:[%s1 + $0x148] sm:$0xff]
  %v56 = vld [vmem:[%s1 + $0x150] sm:$0xff]
  %v57 = vld [vmem:[%s1 + $0x158] sm:$0xff]
  %v58 = vld [vmem:[%s1 + $0x160] sm:$0xff]
  %v59 = vld [vmem:[%s1 + $0x168] sm:$0xff]
  %v60 = vld [vmem:[%s1 + $0x170] sm:$0xff]
  %v61 = vld [vmem:[%s1 + $0x178] sm:$0xff]
  %v62 = vld [vmem:[%s2] sm:$0x7]
  %v64 = vlaneseq
  %v65 = vshrl.u32 %v64, 7
  %v66 = vsub.s32 0, %v65
  %v67 = vrot.slane %v62, %v66
  %v68 = vlaneseq
  %v69 = vshrl.u32 %v68, 7
  %v70 = vsub.s32 1, %v69
  %v71 = vrot.slane %v62, %v70
  %v72 = vlaneseq
  %v73 = vshrl.u32 %v72, 7
  %v74 = vsub.s32 2, %v73
  %v75 = vrot.slane %v62, %v74
  %v79 = vld [vmem:[%s0] sm:$0xff]
  %v80 = vld [vmem:[%s0 + $0x8] sm:$0xff]
  %v81 = vld [vmem:[%s0 + $0x10] sm:$0xff]
  %82 = vmatprep.subr.mxu0 %v15
  %83 = vmatpush1.msra.mxu0 %v14
  %84 = vmatprep.subr.mxu0 %v18
  %85 = vmatpush1.msra.mxu0 %v17
  %86 = vmatprep.subr.mxu0 %v21
  %87 = vmatpush1.msra.mxu0 %v20
  %88 = vmatprep.subr.mxu0 %v24
  %89 = vmatpush1.msra.mxu0 %v23
  %90 = vmatprep.subr.mxu0 %v27
  %91 = vmatpush1.msra.mxu0 %v26
  %92 = vmatprep.subr.mxu0 %v30
  %93 = vmatpush1.msra.mxu0 %v29
  %94 = vmatprep.subr.mxu0 %v33
  %95 = vmatpush1.msra.mxu0 %v32
  %96 = vmatprep.subr.mxu0 %v36
  %97 = vmatpush1.msra.mxu0 %v35
  %98 = vmatprep.subr.mxu0 %v39
  %99 = vmatpush1.msra.mxu0 %v38
  %100 = vmatprep.subr.mxu0 %v42
  %101 = vmatpush1.msra.mxu0 %v41
  %102 = vmatprep.subr.mxu0 %v45
  %103 = vmatpush1.msra.mxu0 %v44
  %104 = vmatprep.subr.mxu0 %v48
  %105 = vmatpush1.msra.mxu0 %v47
  %106 = vmatprep.subr.mxu0 %v51
  %107 = vmatpush1.msra.mxu0 %v50
  %108 = vmatprep.subr.mxu0 %v54
  %109 = vmatpush1.msra.mxu0 %v53
  %110 = vmatprep.subr.mxu0 %v57
  %111 = vmatpush1.msra.mxu0 %v56
  %112 = vmatprep.subr.mxu0 %v60
  %113 = vmatpush1.msra.mxu0 %v59
  %114 = vmatprep.subr.mxu0 0.0
  %115 = vmatpush1.msra.mxu0 0.0
  %116 = vmatprep.subr.mxu0 0.0
  %117 = vmatpush1.msra.mxu0 0.0
  %118 = vmatprep.subr.mxu0 0.0
  %119 = vmatpush1.msra.mxu0 0.0
  %120 = vmatprep.subr.mxu0 0.0
  %121 = vmatpush1.msra.mxu0 0.0
  %122 = vmatprep.subr.mxu0 0.0
  %123 = vmatpush1.msra.mxu0 0.0
  %124 = vmatprep.subr.mxu0 0.0
  %125 = vmatpush1.msra.mxu0 0.0
  %126 = vmatprep.subr.mxu0 0.0
  %127 = vmatpush1.msra.mxu0 0.0
  %128 = vmatprep.subr.mxu0 0.0
  %129 = vmatpush1.msra.mxu0 0.0
  %130 = vmatprep.subr.mxu0 0.0
  %131 = vmatpush1.msra.mxu0 0.0
  %132 = vmatprep.subr.mxu0 0.0
  %133 = vmatpush1.msra.mxu0 0.0
  %134 = vmatprep.subr.mxu0 0.0
  %135 = vmatpush1.msra.mxu0 0.0
  %136 = vmatprep.subr.mxu0 0.0
  %137 = vmatpush1.msra.mxu0 0.0
  %138 = vmatprep.subr.mxu0 0.0
  %139 = vmatpush1.msra.mxu0 0.0
  %140 = vmatprep.subr.mxu0 0.0
  %141 = vmatpush1.msra.mxu0 0.0
  %142 = vmatprep.subr.mxu0 0.0
  %143 = vmatpush1.msra.mxu0 0.0
  %144 = vmatprep.subr.mxu0 0.0
  %145 = vmatpush1.msra.mxu0 0.0
  %146 = vmatprep.mubr.f32.mxu0 0.0
  %147 = vmatmul.mubr.f32.gmra.mrb[0].mxu0 0.0
  %v148 = vpop.f32.mrb[0].mxu0
  %v149 = vadd.f32 %v67, %v148
  %v150 = vpop.f32.mrb[0].mxu0
  %v151 = vadd.f32 %v71, %v150
  %152 = vdwg.mxu0
  %153 = vmatprep.subr.mxu0 0.0
  %154 = vmatpush1.msra.mxu0 %v16
  %155 = vmatprep.subr.mxu0 0.0
  %156 = vmatpush1.msra.mxu0 %v19
  %157 = vmatprep.subr.mxu0 0.0
  %158 = vmatpush1.msra.mxu0 %v22
  %159 = vmatprep.subr.mxu0 0.0
  %160 = vmatpush1.msra.mxu0 %v25
  %161 = vmatprep.subr.mxu0 0.0
  %162 = vmatpush1.msra.mxu0 %v28
  %163 = vmatprep.subr.mxu0 0.0
  %164 = vmatpush1.msra.mxu0 %v31
  %165 = vmatprep.subr.mxu0 0.0
  %166 = vmatpush1.msra.mxu0 %v34
  %167 = vmatprep.subr.mxu0 0.0
  %168 = vmatpush1.msra.mxu0 %v37
  %169 = vmatprep.subr.mxu0 0.0
  %170 = vmatpush1.msra.mxu0 %v40
  %171 = vmatprep.subr.mxu0 0.0
  %172 = vmatpush1.msra.mxu0 %v43
  %173 = vmatprep.subr.mxu0 0.0
  %174 = vmatpush1.msra.mxu0 %v46
  %175 = vmatprep.subr.mxu0 0.0
  %176 = vmatpush1.msra.mxu0 %v49
  %177 = vmatprep.subr.mxu0 0.0
  %178 = vmatpush1.msra.mxu0 %v52
  %179 = vmatprep.subr.mxu0 0.0
  %180 = vmatpush1.msra.mxu0 %v55
  %181 = vmatprep.subr.mxu0 0.0
  %182 = vmatpush1.msra.mxu0 %v58
  %183 = vmatprep.subr.mxu0 0.0
  %184 = vmatpush1.msra.mxu0 %v61
  %185 = vmatprep.subr.mxu0 0.0
  %186 = vmatpush1.msra.mxu0 0.0
  %187 = vmatprep.subr.mxu0 0.0
  %188 = vmatpush1.msra.mxu0 0.0
  %189 = vmatprep.subr.mxu0 0.0
  %190 = vmatpush1.msra.mxu0 0.0
  %191 = vmatprep.subr.mxu0 0.0
  %192 = vmatpush1.msra.mxu0 0.0
  %193 = vmatprep.subr.mxu0 0.0
  %194 = vmatpush1.msra.mxu0 0.0
  %195 = vmatprep.subr.mxu0 0.0
  %196 = vmatpush1.msra.mxu0 0.0
  %197 = vmatprep.subr.mxu0 0.0
  %198 = vmatpush1.msra.mxu0 0.0
  %199 = vmatprep.subr.mxu0 0.0
  %200 = vmatpush1.msra.mxu0 0.0
  %201 = vmatprep.subr.mxu0 0.0
  %202 = vmatpush1.msra.mxu0 0.0
  %203 = vmatprep.subr.mxu0 0.0
  %204 = vmatpush1.msra.mxu0 0.0
  %205 = vmatprep.subr.mxu0 0.0
  %206 = vmatpush1.msra.mxu0 0.0
  %207 = vmatprep.subr.mxu0 0.0
  %208 = vmatpush1.msra.mxu0 0.0
  %209 = vmatprep.subr.mxu0 0.0
  %210 = vmatpush1.msra.mxu0 0.0
  %211 = vmatprep.subr.mxu0 0.0
  %212 = vmatpush1.msra.mxu0 0.0
  %213 = vmatprep.subr.mxu0 0.0
  %214 = vmatpush1.msra.mxu0 0.0
  %215 = vmatprep.subr.mxu0 0.0
  %216 = vmatpush1.msra.mxu0 0.0
  %217 = vmatprep.mubr.f32.mxu0 0.0
  %218 = vmatmul.mubr.f32.gmra.mrb[0].mxu0 0.0
  %v219 = vpop.f32.mrb[0].mxu0
  %v220 = vadd.f32 %v75, %v219
  %v221 = vpop.f32.mrb[0].mxu0
  %222 = vdwg.mxu0
  %v223 = vadd.f32 %v79, %v149
  %v224 = vxor.u32 %v223, 2147483648
  %v225 = vmul.f32 %v224, 1.442695
  %v226 = vpow.pop %v225
  %v227 = vadd.f32 %v226, 1.0
  %v228 = vrcp.pop %v227
  %v229 = vmul.f32 1.0, %v228
  %v230 = vadd.f32 %v80, %v151
  %v231 = vxor.u32 %v230, 2147483648
  %v232 = vmul.f32 %v231, 1.442695
  %v233 = vpow.pop %v232
  %v234 = vadd.f32 %v233, 1.0
  %v235 = vrcp.pop %v234
  %v236 = vmul.f32 1.0, %v235
  %v237 = vmul.f32 %v229, %v220
  %v238 = vadd.f32 %v81, %v237
  %v239 = vtanh.pop %v238
  %v240 = vsub.f32 0.0, %v239
  %v241 = vmul.f32 %v236, %v240
  %v242 = vadd.f32 %v239, %v241
  %s243 = scalar_lea.vmem %s0, 24
  %v244 = vld [vmem:[%s243] sm:$0xff]
  %v245 = vld [vmem:[%s243 + $0x8] sm:$0xff]
  %v246 = vld [vmem:[%s243 + $0x10] sm:$0xff]
  %247 = vmatprep.subr.mxu0 %v15
  %248 = vmatpush1.msra.mxu0 %v14
  %249 = vmatprep.subr.mxu0 %v18
  %250 = vmatpush1.msra.mxu0 %v17
  %251 = vmatprep.subr.mxu0 %v21
  %252 = vmatpush1.msra.mxu0 %v20
  %253 = vmatprep.subr.mxu0 %v24
  %254 = vmatpush1.msra.mxu0 %v23
  %255 = vmatprep.subr.mxu0 %v27
  %256 = vmatpush1.msra.mxu0 %v26
  %257 = vmatprep.subr.mxu0 %v30
  %258 = vmatpush1.msra.mxu0 %v29
  %259 = vmatprep.subr.mxu0 %v33
  %260 = vmatpush1.msra.mxu0 %v32
  %261 = vmatprep.subr.mxu0 %v36
  %262 = vmatpush1.msra.mxu0 %v35
  %263 = vmatprep.subr.mxu0 %v39
  %264 = vmatpush1.msra.mxu0 %v38
  %265 = vmatprep.subr.mxu0 %v42
  %266 = vmatpush1.msra.mxu0 %v41
  %267 = vmatprep.subr.mxu0 %v45
  %268 = vmatpush1.msra.mxu0 %v44
  %269 = vmatprep.subr.mxu0 %v48
  %270 = vmatpush1.msra.mxu0 %v47
  %271 = vmatprep.subr.mxu0 %v51
  %272 = vmatpush1.msra.mxu0 %v50
  %273 = vmatprep.subr.mxu0 %v54
  %274 = vmatpush1.msra.mxu0 %v53
  %275 = vmatprep.subr.mxu0 %v57
  %276 = vmatpush1.msra.mxu0 %v56
  %277 = vmatprep.subr.mxu0 %v60
  %278 = vmatpush1.msra.mxu0 %v59
  %279 = vmatprep.subr.mxu0 0.0
  %280 = vmatpush1.msra.mxu0 0.0
  %281 = vmatprep.subr.mxu0 0.0
  %282 = vmatpush1.msra.mxu0 0.0
  %283 = vmatprep.subr.mxu0 0.0
  %284 = vmatpush1.msra.mxu0 0.0
  %285 = vmatprep.subr.mxu0 0.0
  %286 = vmatpush1.msra.mxu0 0.0
  %287 = vmatprep.subr.mxu0 0.0
  %288 = vmatpush1.msra.mxu0 0.0
  %289 = vmatprep.subr.mxu0 0.0
  %290 = vmatpush1.msra.mxu0 0.0
  %291 = vmatprep.subr.mxu0 0.0
  %292 = vmatpush1.msra.mxu0 0.0
  %293 = vmatprep.subr.mxu0 0.0
  %294 = vmatpush1.msra.mxu0 0.0
  %295 = vmatprep.subr.mxu0 0.0
  %296 = vmatpush1.msra.mxu0 0.0
  %297 = vmatprep.subr.mxu0 0.0
  %298 = vmatpush1.msra.mxu0 0.0
  %299 = vmatprep.subr.mxu0 0.0
  %300 = vmatpush1.msra.mxu0 0.0
  %301 = vmatprep.subr.mxu0 0.0
  %302 = vmatpush1.msra.mxu0 0.0
  %303 = vmatprep.subr.mxu0 0.0
  %304 = vmatpush1.msra.mxu0 0.0
  %305 = vmatprep.subr.mxu0 0.0
  %306 = vmatpush1.msra.mxu0 0.0
  %307 = vmatprep.subr.mxu0 0.0
  %308 = vmatpush1.msra.mxu0 0.0
  %309 = vmatprep.subr.mxu0 0.0
  %310 = vmatpush1.msra.mxu0 0.0
  %311 = vmatprep.mubr.f32.mxu0 0.0
  %312 = vmatmul.mubr.f32.gmra.mrb[0].mxu0 %v242
  %v313 = vpop.f32.mrb[0].mxu0
  %v314 = vadd.f32 %v67, %v313
  %v315 = vpop.f32.mrb[0].mxu0
  %v316 = vadd.f32 %v71, %v315
  %317 = vdwg.mxu0
  %318 = vmatprep.subr.mxu0 0.0
  %319 = vmatpush1.msra.mxu0 %v16
  %320 = vmatprep.subr.mxu0 0.0
  %321 = vmatpush1.msra.mxu0 %v19
  %322 = vmatprep.subr.mxu0 0.0
  %323 = vmatpush1.msra.mxu0 %v22
  %324 = vmatprep.subr.mxu0 0.0
  %325 = vmatpush1.msra.mxu0 %v25
  %326 = vmatprep.subr.mxu0 0.0
  %327 = vmatpush1.msra.mxu0 %v28
  %328 = vmatprep.subr.mxu0 0.0
  %329 = vmatpush1.msra.mxu0 %v31
  %330 = vmatprep.subr.mxu0 0.0
  %331 = vmatpush1.msra.mxu0 %v34
  %332 = vmatprep.subr.mxu0 0.0
  %333 = vmatpush1.msra.mxu0 %v37
  %334 = vmatprep.subr.mxu0 0.0
  %335 = vmatpush1.msra.mxu0 %v40
  %336 = vmatprep.subr.mxu0 0.0
  %337 = vmatpush1.msra.mxu0 %v43
  %338 = vmatprep.subr.mxu0 0.0
  %339 = vmatpush1.msra.mxu0 %v46
  %340 = vmatprep.subr.mxu0 0.0
  %341 = vmatpush1.msra.mxu0 %v49
  %342 = vmatprep.subr.mxu0 0.0
  %343 = vmatpush1.msra.mxu0 %v52
  %344 = vmatprep.subr.mxu0 0.0
  %345 = vmatpush1.msra.mxu0 %v55
  %346 = vmatprep.subr.mxu0 0.0
  %347 = vmatpush1.msra.mxu0 %v58
  %348 = vmatprep.subr.mxu0 0.0
  %349 = vmatpush1.msra.mxu0 %v61
  %350 = vmatprep.subr.mxu0 0.0
  %351 = vmatpush1.msra.mxu0 0.0
  %352 = vmatprep.subr.mxu0 0.0
  %353 = vmatpush1.msra.mxu0 0.0
  %354 = vmatprep.subr.mxu0 0.0
  %355 = vmatpush1.msra.mxu0 0.0
  %356 = vmatprep.subr.mxu0 0.0
  %357 = vmatpush1.msra.mxu0 0.0
  %358 = vmatprep.subr.mxu0 0.0
  %359 = vmatpush1.msra.mxu0 0.0
  %360 = vmatprep.subr.mxu0 0.0
  %361 = vmatpush1.msra.mxu0 0.0
  %362 = vmatprep.subr.mxu0 0.0
  %363 = vmatpush1.msra.mxu0 0.0
  %364 = vmatprep.subr.mxu0 0.0
  %365 = vmatpush1.msra.mxu0 0.0
  %366 = vmatprep.subr.mxu0 0.0
  %367 = vmatpush1.msra.mxu0 0.0
  %368 = vmatprep.subr.mxu0 0.0
  %369 = vmatpush1.msra.mxu0 0.0
  %370 = vmatprep.subr.mxu0 0.0
  %371 = vmatpush1.msra.mxu0 0.0
  %372 = vmatprep.subr.mxu0 0.0
  %373 = vmatpush1.msra.mxu0 0.0
  %374 = vmatprep.subr.mxu0 0.0
  %375 = vmatpush1.msra.mxu0 0.0
  %376 = vmatprep.subr.mxu0 0.0
  %377 = vmatpush1.msra.mxu0 0.0
  %378 = vmatprep.subr.mxu0 0.0
  %379 = vmatpush1.msra.mxu0 0.0
  %380 = vmatprep.subr.mxu0 0.0
  %381 = vmatpush1.msra.mxu0 0.0
  %382 = vmatprep.mubr.f32.mxu0 0.0
  %383 = vmatmul.mubr.f32.gmra.mrb[0].mxu0 %v242
  %v384 = vpop.f32.mrb[0].mxu0
  %v385 = vadd.f32 %v75, %v384
  %v386 = vpop.f32.mrb[0].mxu0
  %387 = vdwg.mxu0
  %v388 = vadd.f32 %v244, %v314
  %v389 = vxor.u32 %v388, 2147483648
  %v390 = vmul.f32 %v389, 1.442695
  %v391 = vpow.pop %v390
  %v392 = vadd.f32 %v391, 1.0
  %v393 = vrcp.pop %v392
  %v394 = vmul.f32 1.0, %v393
  %v395 = vadd.f32 %v245, %v316
  %v396 = vxor.u32 %v395, 2147483648
  %v397 = vmul.f32 %v396, 1.442695
  %v398 = vpow.pop %v397
  %v399 = vadd.f32 %v398, 1.0
  %v400 = vrcp.pop %v399
  %v401 = vmul.f32 1.0, %v400
  %v402 = vmul.f32 %v394, %v385
  %v403 = vadd.f32 %v246, %v402
  %v404 = vtanh.pop %v403
  %v405 = vsub.f32 %v242, %v404
  %v406 = vmul.f32 %v401, %v405
  %v407 = vadd.f32 %v404, %v406
  %s408 = scalar_lea.vmem %s0, 48
  %v409 = vld [vmem:[%s408] sm:$0xff]
  %v410 = vld [vmem:[%s408 + $0x8] sm:$0xff]
  %v411 = vld [vmem:[%s408 + $0x10] sm:$0xff]
  %412 = vmatprep.subr.mxu0 %v15
  %413 = vmatpush1.msra.mxu0 %v14
  %414 = vmatprep.subr.mxu0 %v18
  %415 = vmatpush1.msra.mxu0 %v17
  %416 = vmatprep.subr.mxu0 %v21
  %417 = vmatpush1.msra.mxu0 %v20
  %418 = vmatprep.subr.mxu0 %v24
  %419 = vmatpush1.msra.mxu0 %v23
  %420 = vmatprep.subr.mxu0 %v27
  %421 = vmatpush1.msra.mxu0 %v26
  %422 = vmatprep.subr.mxu0 %v30
  %423 = vmatpush1.msra.mxu0 %v29
  %424 = vmatprep.subr.mxu0 %v33
  %425 = vmatpush1.msra.mxu0 %v32
  %426 = vmatprep.subr.mxu0 %v36
  %427 = vmatpush1.msra.mxu0 %v35
  %428 = vmatprep.subr.mxu0 %v39
  %429 = vmatpush1.msra.mxu0 %v38
  %430 = vmatprep.subr.mxu0 %v42
  %431 = vmatpush1.msra.mxu0 %v41
  %432 = vmatprep.subr.mxu0 %v45
  %433 = vmatpush1.msra.mxu0 %v44
  %434 = vmatprep.subr.mxu0 %v48
  %435 = vmatpush1.msra.mxu0 %v47
  %436 = vmatprep.subr.mxu0 %v51
  %437 = vmatpush1.msra.mxu0 %v50
  %438 = vmatprep.subr.mxu0 %v54
  %439 = vmatpush1.msra.mxu0 %v53
  %440 = vmatprep.subr.mxu0 %v57
  %441 = vmatpush1.msra.mxu0 %v56
  %442 = vmatprep.subr.mxu0 %v60
  %443 = vmatpush1.msra.mxu0 %v59
  %444 = vmatprep.subr.mxu0 0.0
  %445 = vmatpush1.msra.mxu0 0.0
  %446 = vmatprep.subr.mxu0 0.0
  %447 = vmatpush1.msra.mxu0 0.0
  %448 = vmatprep.subr.mxu0 0.0
  %449 = vmatpush1.msra.mxu0 0.0
  %450 = vmatprep.subr.mxu0 0.0
  %451 = vmatpush1.msra.mxu0 0.0
  %452 = vmatprep.subr.mxu0 0.0
  %453 = vmatpush1.msra.mxu0 0.0
  %454 = vmatprep.subr.mxu0 0.0
  %455 = vmatpush1.msra.mxu0 0.0
  %456 = vmatprep.subr.mxu0 0.0
  %457 = vmatpush1.msra.mxu0 0.0
  %458 = vmatprep.subr.mxu0 0.0
  %459 = vmatpush1.msra.mxu0 0.0
  %460 = vmatprep.subr.mxu0 0.0
  %461 = vmatpush1.msra.mxu0 0.0
  %462 = vmatprep.subr.mxu0 0.0
  %463 = vmatpush1.msra.mxu0 0.0
  %464 = vmatprep.subr.mxu0 0.0
  %465 = vmatpush1.msra.mxu0 0.0
  %466 = vmatprep.subr.mxu0 0.0
  %467 = vmatpush1.msra.mxu0 0.0
  %468 = vmatprep.subr.mxu0 0.0
  %469 = vmatpush1.msra.mxu0 0.0
  %470 = vmatprep.subr.mxu0 0.0
  %471 = vmatpush1.msra.mxu0 0.0
  %472 = vmatprep.subr.mxu0 0.0
  %473 = vmatpush1.msra.mxu0 0.0
  %474 = vmatprep.subr.mxu0 0.0
  %475 = vmatpush1.msra.mxu0 0.0
  %476 = vmatprep.mubr.f32.mxu0 0.0
  %477 = vmatmul.mubr.f32.gmra.mrb[0].mxu0 %v407
  %v478 = vpop.f32.mrb[0].mxu0
  %v479 = vadd.f32 %v67, %v478
  %v480 = vpop.f32.mrb[0].mxu0
  %v481 = vadd.f32 %v71, %v480
  %482 = vdwg.mxu0
  %483 = vmatprep.subr.mxu0 0.0
  %484 = vmatpush1.msra.mxu0 %v16
  %485 = vmatprep.subr.mxu0 0.0
  %486 = vmatpush1.msra.mxu0 %v19
  %487 = vmatprep.subr.mxu0 0.0
  %488 = vmatpush1.msra.mxu0 %v22
  %489 = vmatprep.subr.mxu0 0.0
  %490 = vmatpush1.msra.mxu0 %v25
  %491 = vmatprep.subr.mxu0 0.0
  %492 = vmatpush1.msra.mxu0 %v28
  %493 = vmatprep.subr.mxu0 0.0
  %494 = vmatpush1.msra.mxu0 %v31
  %495 = vmatprep.subr.mxu0 0.0
  %496 = vmatpush1.msra.mxu0 %v34
  %497 = vmatprep.subr.mxu0 0.0
  %498 = vmatpush1.msra.mxu0 %v37
  %499 = vmatprep.subr.mxu0 0.0
  %500 = vmatpush1.msra.mxu0 %v40
  %501 = vmatprep.subr.mxu0 0.0
  %502 = vmatpush1.msra.mxu0 %v43
  %503 = vmatprep.subr.mxu0 0.0
  %504 = vmatpush1.msra.mxu0 %v46
  %505 = vmatprep.subr.mxu0 0.0
  %506 = vmatpush1.msra.mxu0 %v49
  %507 = vmatprep.subr.mxu0 0.0
  %508 = vmatpush1.msra.mxu0 %v52
  %509 = vmatprep.subr.mxu0 0.0
  %510 = vmatpush1.msra.mxu0 %v55
  %511 = vmatprep.subr.mxu0 0.0
  %512 = vmatpush1.msra.mxu0 %v58
  %513 = vmatprep.subr.mxu0 0.0
  %514 = vmatpush1.msra.mxu0 %v61
  %515 = vmatprep.subr.mxu0 0.0
  %516 = vmatpush1.msra.mxu0 0.0
  %517 = vmatprep.subr.mxu0 0.0
  %518 = vmatpush1.msra.mxu0 0.0
  %519 = vmatprep.subr.mxu0 0.0
  %520 = vmatpush1.msra.mxu0 0.0
  %521 = vmatprep.subr.mxu0 0.0
  %522 = vmatpush1.msra.mxu0 0.0
  %523 = vmatprep.subr.mxu0 0.0
  %524 = vmatpush1.msra.mxu0 0.0
  %525 = vmatprep.subr.mxu0 0.0
  %526 = vmatpush1.msra.mxu0 0.0
  %527 = vmatprep.subr.mxu0 0.0
  %528 = vmatpush1.msra.mxu0 0.0
  %529 = vmatprep.subr.mxu0 0.0
  %530 = vmatpush1.msra.mxu0 0.0
  %531 = vmatprep.subr.mxu0 0.0
  %532 = vmatpush1.msra.mxu0 0.0
  %533 = vmatprep.subr.mxu0 0.0
  %534 = vmatpush1.msra.mxu0 0.0
  %535 = vmatprep.subr.mxu0 0.0
  %536 = vmatpush1.msra.mxu0 0.0
  %537 = vmatprep.subr.mxu0 0.0
  %538 = vmatpush1.msra.mxu0 0.0
  %539 = vmatprep.subr.mxu0 0.0
  %540 = vmatpush1.msra.mxu0 0.0
  %541 = vmatprep.subr.mxu0 0.0
  %542 = vmatpush1.msra.mxu0 0.0
  %543 = vmatprep.subr.mxu0 0.0
  %544 = vmatpush1.msra.mxu0 0.0
  %545 = vmatprep.subr.mxu0 0.0
  %546 = vmatpush1.msra.mxu0 0.0
  %547 = vmatprep.mubr.f32.mxu0 0.0
  %548 = vmatmul.mubr.f32.gmra.mrb[0].mxu0 %v407
  %v549 = vpop.f32.mrb[0].mxu0
  %v550 = vadd.f32 %v75, %v549
  %v551 = vpop.f32.mrb[0].mxu0
  %552 = vdwg.mxu0
  %v553 = vadd.f32 %v409, %v479
  %v554 = vxor.u32 %v553, 2147483648
  %v555 = vmul.f32 %v554, 1.442695
  %v556 = vpow.pop %v555
  %v557 = vadd.f32 %v556, 1.0
  %v558 = vrcp.pop %v557
  %v559 = vmul.f32 1.0, %v558
  %v560 = vadd.f32 %v410, %v481
  %v561 = vxor.u32 %v560, 2147483648
  %v562 = vmul.f32 %v561, 1.442695
  %v563 = vpow.pop %v562
  %v564 = vadd.f32 %v563, 1.0
  %v565 = vrcp.pop %v564
  %v566 = vmul.f32 1.0, %v565
  %v567 = vmul.f32 %v559, %v550
  %v568 = vadd.f32 %v411, %v567
  %v569 = vtanh.pop %v568
  %v570 = vsub.f32 %v407, %v569
  %v571 = vmul.f32 %v566, %v570
  %v572 = vadd.f32 %v569, %v571
  %s573 = scalar_lea.vmem %s0, 72
  %v574 = vld [vmem:[%s573] sm:$0xff]
  %v575 = vld [vmem:[%s573 + $0x8] sm:$0xff]
  %v576 = vld [vmem:[%s573 + $0x10] sm:$0xff]
  %577 = vmatprep.subr.mxu0 %v15
  %578 = vmatpush1.msra.mxu0 %v14
  %579 = vmatprep.subr.mxu0 %v18
  %580 = vmatpush1.msra.mxu0 %v17
  %581 = vmatprep.subr.mxu0 %v21
  %582 = vmatpush1.msra.mxu0 %v20
  %583 = vmatprep.subr.mxu0 %v24
  %584 = vmatpush1.msra.mxu0 %v23
  %585 = vmatprep.subr.mxu0 %v27
  %586 = vmatpush1.msra.mxu0 %v26
  %587 = vmatprep.subr.mxu0 %v30
  %588 = vmatpush1.msra.mxu0 %v29
  %589 = vmatprep.subr.mxu0 %v33
  %590 = vmatpush1.msra.mxu0 %v32
  %591 = vmatprep.subr.mxu0 %v36
  %592 = vmatpush1.msra.mxu0 %v35
  %593 = vmatprep.subr.mxu0 %v39
  %594 = vmatpush1.msra.mxu0 %v38
  %595 = vmatprep.subr.mxu0 %v42
  %596 = vmatpush1.msra.mxu0 %v41
  %597 = vmatprep.subr.mxu0 %v45
  %598 = vmatpush1.msra.mxu0 %v44
  %599 = vmatprep.subr.mxu0 %v48
  %600 = vmatpush1.msra.mxu0 %v47
  %601 = vmatprep.subr.mxu0 %v51
  %602 = vmatpush1.msra.mxu0 %v50
  %603 = vmatprep.subr.mxu0 %v54
  %604 = vmatpush1.msra.mxu0 %v53
  %605 = vmatprep.subr.mxu0 %v57
  %606 = vmatpush1.msra.mxu0 %v56
  %607 = vmatprep.subr.mxu0 %v60
  %608 = vmatpush1.msra.mxu0 %v59
  %609 = vmatprep.subr.mxu0 0.0
  %610 = vmatpush1.msra.mxu0 0.0
  %611 = vmatprep.subr.mxu0 0.0
  %612 = vmatpush1.msra.mxu0 0.0
  %613 = vmatprep.subr.mxu0 0.0
  %614 = vmatpush1.msra.mxu0 0.0
  %615 = vmatprep.subr.mxu0 0.0
  %616 = vmatpush1.msra.mxu0 0.0
  %617 = vmatprep.subr.mxu0 0.0
  %618 = vmatpush1.msra.mxu0 0.0
  %619 = vmatprep.subr.mxu0 0.0
  %620 = vmatpush1.msra.mxu0 0.0
  %621 = vmatprep.subr.mxu0 0.0
  %622 = vmatpush1.msra.mxu0 0.0
  %623 = vmatprep.subr.mxu0 0.0
  %624 = vmatpush1.msra.mxu0 0.0
  %625 = vmatprep.subr.mxu0 0.0
  %626 = vmatpush1.msra.mxu0 0.0
  %627 = vmatprep.subr.mxu0 0.0
  %628 = vmatpush1.msra.mxu0 0.0
  %629 = vmatprep.subr.mxu0 0.0
  %630 = vmatpush1.msra.mxu0 0.0
  %631 = vmatprep.subr.mxu0 0.0
  %632 = vmatpush1.msra.mxu0 0.0
  %633 = vmatprep.subr.mxu0 0.0
  %634 = vmatpush1.msra.mxu0 0.0
  %635 = vmatprep.subr.mxu0 0.0
  %636 = vmatpush1.msra.mxu0 0.0
  %637 = vmatprep.subr.mxu0 0.0
  %638 = vmatpush1.msra.mxu0 0.0
  %639 = vmatprep.subr.mxu0 0.0
  %640 = vmatpush1.msra.mxu0 0.0
  %641 = vmatprep.mubr.f32.mxu0 0.0
  %642 = vmatmul.mubr.f32.gmra.mrb[0].mxu0 %v572
  %v643 = vpop.f32.mrb[0].mxu0
  %v644 = vadd.f32 %v67, %v643
  %v645 = vpop.f32.mrb[0].mxu0
  %v646 = vadd.f32 %v71, %v645
  %647 = vdwg.mxu0
  %648 = vmatprep.subr.mxu0 0.0
  %649 = vmatpush1.msra.mxu0 %v16
  %650 = vmatprep.subr.mxu0 0.0
  %651 = vmatpush1.msra.mxu0 %v19
  %652 = vmatprep.subr.mxu0 0.0
  %653 = vmatpush1.msra.mxu0 %v22
  %654 = vmatprep.subr.mxu0 0.0
  %655 = vmatpush1.msra.mxu0 %v25
  %656 = vmatprep.subr.mxu0 0.0
  %657 = vmatpush1.msra.mxu0 %v28
  %658 = vmatprep.subr.mxu0 0.0
  %659 = vmatpush1.msra.mxu0 %v31
  %660 = vmatprep.subr.mxu0 0.0
  %661 = vmatpush1.msra.mxu0 %v34
  %662 = vmatprep.subr.mxu0 0.0
  %663 = vmatpush1.msra.mxu0 %v37
  %664 = vmatprep.subr.mxu0 0.0
  %665 = vmatpush1.msra.mxu0 %v40
  %666 = vmatprep.subr.mxu0 0.0
  %667 = vmatpush1.msra.mxu0 %v43
  %668 = vmatprep.subr.mxu0 0.0
  %669 = vmatpush1.msra.mxu0 %v46
  %670 = vmatprep.subr.mxu0 0.0
  %671 = vmatpush1.msra.mxu0 %v49
  %672 = vmatprep.subr.mxu0 0.0
  %673 = vmatpush1.msra.mxu0 %v52
  %674 = vmatprep.subr.mxu0 0.0
  %675 = vmatpush1.msra.mxu0 %v55
  %676 = vmatprep.subr.mxu0 0.0
  %677 = vmatpush1.msra.mxu0 %v58
  %678 = vmatprep.subr.mxu0 0.0
  %679 = vmatpush1.msra.mxu0 %v61
  %680 = vmatprep.subr.mxu0 0.0
  %681 = vmatpush1.msra.mxu0 0.0
  %682 = vmatprep.subr.mxu0 0.0
  %683 = vmatpush1.msra.mxu0 0.0
  %684 = vmatprep.subr.mxu0 0.0
  %685 = vmatpush1.msra.mxu0 0.0
  %686 = vmatprep.subr.mxu0 0.0
  %687 = vmatpush1.msra.mxu0 0.0
  %688 = vmatprep.subr.mxu0 0.0
  %689 = vmatpush1.msra.mxu0 0.0
  %690 = vmatprep.subr.mxu0 0.0
  %691 = vmatpush1.msra.mxu0 0.0
  %692 = vmatprep.subr.mxu0 0.0
  %693 = vmatpush1.msra.mxu0 0.0
  %694 = vmatprep.subr.mxu0 0.0
  %695 = vmatpush1.msra.mxu0 0.0
  %696 = vmatprep.subr.mxu0 0.0
  %697 = vmatpush1.msra.mxu0 0.0
  %698 = vmatprep.subr.mxu0 0.0
  %699 = vmatpush1.msra.mxu0 0.0
  %700 = vmatprep.subr.mxu0 0.0
  %701 = vmatpush1.msra.mxu0 0.0
  %702 = vmatprep.subr.mxu0 0.0
  %703 = vmatpush1.msra.mxu0 0.0
  %704 = vmatprep.subr.mxu0 0.0
  %705 = vmatpush1.msra.mxu0 0.0
  %706 = vmatprep.subr.mxu0 0.0
  %707 = vmatpush1.msra.mxu0 0.0
  %708 = vmatprep.subr.mxu0 0.0
  %709 = vmatpush1.msra.mxu0 0.0
  %710 = vmatprep.subr.mxu0 0.0
  %711 = vmatpush1.msra.mxu0 0.0
  %712 = vmatprep.mubr.f32.mxu0 0.0
  %713 = vmatmul.mubr.f32.gmra.mrb[0].mxu0 %v572
  %v714 = vpop.f32.mrb[0].mxu0
  %v715 = vadd.f32 %v75, %v714
  %v716 = vpop.f32.mrb[0].mxu0
  %717 = vdwg.mxu0
  %v718 = vadd.f32 %v574, %v644
  %v719 = vxor.u32 %v718, 2147483648
  %v720 = vmul.f32 %v719, 1.442695
  %v721 = vpow.pop %v720
  %v722 = vadd.f32 %v721, 1.0
  %v723 = vrcp.pop %v722
  %v724 = vmul.f32 1.0, %v723
  %v725 = vadd.f32 %v575, %v646
  %v726 = vxor.u32 %v725, 2147483648
  %v727 = vmul.f32 %v726, 1.442695
  %v728 = vpow.pop %v727
  %v729 = vadd.f32 %v728, 1.0
  %v730 = vrcp.pop %v729
  %v731 = vmul.f32 1.0, %v730
  %v732 = vmul.f32 %v724, %v715
  %v733 = vadd.f32 %v576, %v732
  %v734 = vtanh.pop %v733
  %v735 = vsub.f32 %v572, %v734
  %v736 = vmul.f32 %v731, %v735
  %v737 = vadd.f32 %v734, %v736
  %s738 = scalar_lea.vmem %s0, 96
  %v739 = vld [vmem:[%s738] sm:$0xff]
  %v740 = vld [vmem:[%s738 + $0x8] sm:$0xff]
  %v741 = vld [vmem:[%s738 + $0x10] sm:$0xff]
  %742 = vmatprep.subr.mxu0 %v15
  %743 = vmatpush1.msra.mxu0 %v14
  %744 = vmatprep.subr.mxu0 %v18
  %745 = vmatpush1.msra.mxu0 %v17
  %746 = vmatprep.subr.mxu0 %v21
  %747 = vmatpush1.msra.mxu0 %v20
  %748 = vmatprep.subr.mxu0 %v24
  %749 = vmatpush1.msra.mxu0 %v23
  %750 = vmatprep.subr.mxu0 %v27
  %751 = vmatpush1.msra.mxu0 %v26
  %752 = vmatprep.subr.mxu0 %v30
  %753 = vmatpush1.msra.mxu0 %v29
  %754 = vmatprep.subr.mxu0 %v33
  %755 = vmatpush1.msra.mxu0 %v32
  %756 = vmatprep.subr.mxu0 %v36
  %757 = vmatpush1.msra.mxu0 %v35
  %758 = vmatprep.subr.mxu0 %v39
  %759 = vmatpush1.msra.mxu0 %v38
  %760 = vmatprep.subr.mxu0 %v42
  %761 = vmatpush1.msra.mxu0 %v41
  %762 = vmatprep.subr.mxu0 %v45
  %763 = vmatpush1.msra.mxu0 %v44
  %764 = vmatprep.subr.mxu0 %v48
  %765 = vmatpush1.msra.mxu0 %v47
  %766 = vmatprep.subr.mxu0 %v51
  %767 = vmatpush1.msra.mxu0 %v50
  %768 = vmatprep.subr.mxu0 %v54
  %769 = vmatpush1.msra.mxu0 %v53
  %770 = vmatprep.subr.mxu0 %v57
  %771 = vmatpush1.msra.mxu0 %v56
  %772 = vmatprep.subr.mxu0 %v60
  %773 = vmatpush1.msra.mxu0 %v59
  %774 = vmatprep.subr.mxu0 0.0
  %775 = vmatpush1.msra.mxu0 0.0
  %776 = vmatprep.subr.mxu0 0.0
  %777 = vmatpush1.msra.mxu0 0.0
  %778 = vmatprep.subr.mxu0 0.0
  %779 = vmatpush1.msra.mxu0 0.0
  %780 = vmatprep.subr.mxu0 0.0
  %781 = vmatpush1.msra.mxu0 0.0
  %782 = vmatprep.subr.mxu0 0.0
  %783 = vmatpush1.msra.mxu0 0.0
  %784 = vmatprep.subr.mxu0 0.0
  %785 = vmatpush1.msra.mxu0 0.0
  %786 = vmatprep.subr.mxu0 0.0
  %787 = vmatpush1.msra.mxu0 0.0
  %788 = vmatprep.subr.mxu0 0.0
  %789 = vmatpush1.msra.mxu0 0.0
  %790 = vmatprep.subr.mxu0 0.0
  %791 = vmatpush1.msra.mxu0 0.0
  %792 = vmatprep.subr.mxu0 0.0
  %793 = vmatpush1.msra.mxu0 0.0
  %794 = vmatprep.subr.mxu0 0.0
  %795 = vmatpush1.msra.mxu0 0.0
  %796 = vmatprep.subr.mxu0 0.0
  %797 = vmatpush1.msra.mxu0 0.0
  %798 = vmatprep.subr.mxu0 0.0
  %799 = vmatpush1.msra.mxu0 0.0
  %800 = vmatprep.subr.mxu0 0.0
  %801 = vmatpush1.msra.mxu0 0.0
  %802 = vmatprep.subr.mxu0 0.0
  %803 = vmatpush1.msra.mxu0 0.0
  %804 = vmatprep.subr.mxu0 0.0
  %805 = vmatpush1.msra.mxu0 0.0
  %806 = vmatprep.mubr.f32.mxu0 0.0
  %807 = vmatmul.mubr.f32.gmra.mrb[0].mxu0 %v737
  %v808 = vpop.f32.mrb[0].mxu0
  %v809 = vadd.f32 %v67, %v808
  %v810 = vpop.f32.mrb[0].mxu0
  %v811 = vadd.f32 %v71, %v810
  %812 = vdwg.mxu0
  %813 = vmatprep.subr.mxu0 0.0
  %814 = vmatpush1.msra.mxu0 %v16
  %815 = vmatprep.subr.mxu0 0.0
  %816 = vmatpush1.msra.mxu0 %v19
  %817 = vmatprep.subr.mxu0 0.0
  %818 = vmatpush1.msra.mxu0 %v22
  %819 = vmatprep.subr.mxu0 0.0
  %820 = vmatpush1.msra.mxu0 %v25
  %821 = vmatprep.subr.mxu0 0.0
  %822 = vmatpush1.msra.mxu0 %v28
  %823 = vmatprep.subr.mxu0 0.0
  %824 = vmatpush1.msra.mxu0 %v31
  %825 = vmatprep.subr.mxu0 0.0
  %826 = vmatpush1.msra.mxu0 %v34
  %827 = vmatprep.subr.mxu0 0.0
  %828 = vmatpush1.msra.mxu0 %v37
  %829 = vmatprep.subr.mxu0 0.0
  %830 = vmatpush1.msra.mxu0 %v40
  %831 = vmatprep.subr.mxu0 0.0
  %832 = vmatpush1.msra.mxu0 %v43
  %833 = vmatprep.subr.mxu0 0.0
  %834 = vmatpush1.msra.mxu0 %v46
  %835 = vmatprep.subr.mxu0 0.0
  %836 = vmatpush1.msra.mxu0 %v49
  %837 = vmatprep.subr.mxu0 0.0
  %838 = vmatpush1.msra.mxu0 %v52
  %839 = vmatprep.subr.mxu0 0.0
  %840 = vmatpush1.msra.mxu0 %v55
  %841 = vmatprep.subr.mxu0 0.0
  %842 = vmatpush1.msra.mxu0 %v58
  %843 = vmatprep.subr.mxu0 0.0
  %844 = vmatpush1.msra.mxu0 %v61
  %845 = vmatprep.subr.mxu0 0.0
  %846 = vmatpush1.msra.mxu0 0.0
  %847 = vmatprep.subr.mxu0 0.0
  %848 = vmatpush1.msra.mxu0 0.0
  %849 = vmatprep.subr.mxu0 0.0
  %850 = vmatpush1.msra.mxu0 0.0
  %851 = vmatprep.subr.mxu0 0.0
  %852 = vmatpush1.msra.mxu0 0.0
  %853 = vmatprep.subr.mxu0 0.0
  %854 = vmatpush1.msra.mxu0 0.0
  %855 = vmatprep.subr.mxu0 0.0
  %856 = vmatpush1.msra.mxu0 0.0
  %857 = vmatprep.subr.mxu0 0.0
  %858 = vmatpush1.msra.mxu0 0.0
  %859 = vmatprep.subr.mxu0 0.0
  %860 = vmatpush1.msra.mxu0 0.0
  %861 = vmatprep.subr.mxu0 0.0
  %862 = vmatpush1.msra.mxu0 0.0
  %863 = vmatprep.subr.mxu0 0.0
  %864 = vmatpush1.msra.mxu0 0.0
  %865 = vmatprep.subr.mxu0 0.0
  %866 = vmatpush1.msra.mxu0 0.0
  %867 = vmatprep.subr.mxu0 0.0
  %868 = vmatpush1.msra.mxu0 0.0
  %869 = vmatprep.subr.mxu0 0.0
  %870 = vmatpush1.msra.mxu0 0.0
  %871 = vmatprep.subr.mxu0 0.0
  %872 = vmatpush1.msra.mxu0 0.0
  %873 = vmatprep.subr.mxu0 0.0
  %874 = vmatpush1.msra.mxu0 0.0
  %875 = vmatprep.subr.mxu0 0.0
  %876 = vmatpush1.msra.mxu0 0.0
  %877 = vmatprep.mubr.f32.mxu0 0.0
  %878 = vmatmul.mubr.f32.gmra.mrb[0].mxu0 %v737
  %v879 = vpop.f32.mrb[0].mxu0
  %v880 = vadd.f32 %v75, %v879
  %v881 = vpop.f32.mrb[0].mxu0
  %882 = vdwg.mxu0
  %v883 = vadd.f32 %v739, %v809
  %v884 = vxor.u32 %v883, 2147483648
  %v885 = vmul.f32 %v884, 1.442695
  %v886 = vpow.pop %v885
  %v887 = vadd.f32 %v886, 1.0
  %v888 = vrcp.pop %v887
  %v889 = vmul.f32 1.0, %v888
  %v890 = vadd.f32 %v740, %v811
  %v891 = vxor.u32 %v890, 2147483648
  %v892 = vmul.f32 %v891, 1.442695
  %v893 = vpow.pop %v892
  %v894 = vadd.f32 %v893, 1.0
  %v895 = vrcp.pop %v894
  %v896 = vmul.f32 1.0, %v895
  %v897 = vmul.f32 %v889, %v880
  %v898 = vadd.f32 %v741, %v897
  %v899 = vtanh.pop %v898
  %v900 = vsub.f32 %v737, %v899
  %v901 = vmul.f32 %v896, %v900
  %v902 = vadd.f32 %v899, %v901
  %s903 = scalar_lea.vmem %s0, 120
  %v904 = vld [vmem:[%s903] sm:$0xff]
  %v905 = vld [vmem:[%s903 + $0x8] sm:$0xff]
  %v906 = vld [vmem:[%s903 + $0x10] sm:$0xff]
  %907 = vmatprep.subr.mxu0 %v15
  %908 = vmatpush1.msra.mxu0 %v14
  %909 = vmatprep.subr.mxu0 %v18
  %910 = vmatpush1.msra.mxu0 %v17
  %911 = vmatprep.subr.mxu0 %v21
  %912 = vmatpush1.msra.mxu0 %v20
  %913 = vmatprep.subr.mxu0 %v24
  %914 = vmatpush1.msra.mxu0 %v23
  %915 = vmatprep.subr.mxu0 %v27
  %916 = vmatpush1.msra.mxu0 %v26
  %917 = vmatprep.subr.mxu0 %v30
  %918 = vmatpush1.msra.mxu0 %v29
  %919 = vmatprep.subr.mxu0 %v33
  %920 = vmatpush1.msra.mxu0 %v32
  %921 = vmatprep.subr.mxu0 %v36
  %922 = vmatpush1.msra.mxu0 %v35
  %923 = vmatprep.subr.mxu0 %v39
  %924 = vmatpush1.msra.mxu0 %v38
  %925 = vmatprep.subr.mxu0 %v42
  %926 = vmatpush1.msra.mxu0 %v41
  %927 = vmatprep.subr.mxu0 %v45
  %928 = vmatpush1.msra.mxu0 %v44
  %929 = vmatprep.subr.mxu0 %v48
  %930 = vmatpush1.msra.mxu0 %v47
  %931 = vmatprep.subr.mxu0 %v51
  %932 = vmatpush1.msra.mxu0 %v50
  %933 = vmatprep.subr.mxu0 %v54
  %934 = vmatpush1.msra.mxu0 %v53
  %935 = vmatprep.subr.mxu0 %v57
  %936 = vmatpush1.msra.mxu0 %v56
  %937 = vmatprep.subr.mxu0 %v60
  %938 = vmatpush1.msra.mxu0 %v59
  %939 = vmatprep.subr.mxu0 0.0
  %940 = vmatpush1.msra.mxu0 0.0
  %941 = vmatprep.subr.mxu0 0.0
  %942 = vmatpush1.msra.mxu0 0.0
  %943 = vmatprep.subr.mxu0 0.0
  %944 = vmatpush1.msra.mxu0 0.0
  %945 = vmatprep.subr.mxu0 0.0
  %946 = vmatpush1.msra.mxu0 0.0
  %947 = vmatprep.subr.mxu0 0.0
  %948 = vmatpush1.msra.mxu0 0.0
  %949 = vmatprep.subr.mxu0 0.0
  %950 = vmatpush1.msra.mxu0 0.0
  %951 = vmatprep.subr.mxu0 0.0
  %952 = vmatpush1.msra.mxu0 0.0
  %953 = vmatprep.subr.mxu0 0.0
  %954 = vmatpush1.msra.mxu0 0.0
  %955 = vmatprep.subr.mxu0 0.0
  %956 = vmatpush1.msra.mxu0 0.0
  %957 = vmatprep.subr.mxu0 0.0
  %958 = vmatpush1.msra.mxu0 0.0
  %959 = vmatprep.subr.mxu0 0.0
  %960 = vmatpush1.msra.mxu0 0.0
  %961 = vmatprep.subr.mxu0 0.0
  %962 = vmatpush1.msra.mxu0 0.0
  %963 = vmatprep.subr.mxu0 0.0
  %964 = vmatpush1.msra.mxu0 0.0
  %965 = vmatprep.subr.mxu0 0.0
  %966 = vmatpush1.msra.mxu0 0.0
  %967 = vmatprep.subr.mxu0 0.0
  %968 = vmatpush1.msra.mxu0 0.0
  %969 = vmatprep.subr.mxu0 0.0
  %970 = vmatpush1.msra.mxu0 0.0
  %971 = vmatprep.mubr.f32.mxu0 0.0
  %972 = vmatmul.mubr.f32.gmra.mrb[0].mxu0 %v902
  %v973 = vpop.f32.mrb[0].mxu0
  %v974 = vadd.f32 %v67, %v973
  %v975 = vpop.f32.mrb[0].mxu0
  %v976 = vadd.f32 %v71, %v975
  %977 = vdwg.mxu0
  %978 = vmatprep.subr.mxu0 0.0
  %979 = vmatpush1.msra.mxu0 %v16
  %980 = vmatprep.subr.mxu0 0.0
  %981 = vmatpush1.msra.mxu0 %v19
  %982 = vmatprep.subr.mxu0 0.0
  %983 = vmatpush1.msra.mxu0 %v22
  %984 = vmatprep.subr.mxu0 0.0
  %985 = vmatpush1.msra.mxu0 %v25
  %986 = vmatprep.subr.mxu0 0.0
  %987 = vmatpush1.msra.mxu0 %v28
  %988 = vmatprep.subr.mxu0 0.0
  %989 = vmatpush1.msra.mxu0 %v31
  %990 = vmatprep.subr.mxu0 0.0
  %991 = vmatpush1.msra.mxu0 %v34
  %992 = vmatprep.subr.mxu0 0.0
  %993 = vmatpush1.msra.mxu0 %v37
  %994 = vmatprep.subr.mxu0 0.0
  %995 = vmatpush1.msra.mxu0 %v40
  %996 = vmatprep.subr.mxu0 0.0
  %997 = vmatpush1.msra.mxu0 %v43
  %998 = vmatprep.subr.mxu0 0.0
  %999 = vmatpush1.msra.mxu0 %v46
  %1000 = vmatprep.subr.mxu0 0.0
  %1001 = vmatpush1.msra.mxu0 %v49
  %1002 = vmatprep.subr.mxu0 0.0
  %1003 = vmatpush1.msra.mxu0 %v52
  %1004 = vmatprep.subr.mxu0 0.0
  %1005 = vmatpush1.msra.mxu0 %v55
  %1006 = vmatprep.subr.mxu0 0.0
  %1007 = vmatpush1.msra.mxu0 %v58
  %1008 = vmatprep.subr.mxu0 0.0
  %1009 = vmatpush1.msra.mxu0 %v61
  %1010 = vmatprep.subr.mxu0 0.0
  %1011 = vmatpush1.msra.mxu0 0.0
  %1012 = vmatprep.subr.mxu0 0.0
  %1013 = vmatpush1.msra.mxu0 0.0
  %1014 = vmatprep.subr.mxu0 0.0
  %1015 = vmatpush1.msra.mxu0 0.0
  %1016 = vmatprep.subr.mxu0 0.0
  %1017 = vmatpush1.msra.mxu0 0.0
  %1018 = vmatprep.subr.mxu0 0.0
  %1019 = vmatpush1.msra.mxu0 0.0
  %1020 = vmatprep.subr.mxu0 0.0
  %1021 = vmatpush1.msra.mxu0 0.0
  %1022 = vmatprep.subr.mxu0 0.0
  %1023 = vmatpush1.msra.mxu0 0.0
  %1024 = vmatprep.subr.mxu0 0.0
  %1025 = vmatpush1.msra.mxu0 0.0
  %1026 = vmatprep.subr.mxu0 0.0
  %1027 = vmatpush1.msra.mxu0 0.0
  %1028 = vmatprep.subr.mxu0 0.0
  %1029 = vmatpush1.msra.mxu0 0.0
  %1030 = vmatprep.subr.mxu0 0.0
  %1031 = vmatpush1.msra.mxu0 0.0
  %1032 = vmatprep.subr.mxu0 0.0
  %1033 = vmatpush1.msra.mxu0 0.0
  %1034 = vmatprep.subr.mxu0 0.0
  %1035 = vmatpush1.msra.mxu0 0.0
  %1036 = vmatprep.subr.mxu0 0.0
  %1037 = vmatpush1.msra.mxu0 0.0
  %1038 = vmatprep.subr.mxu0 0.0
  %1039 = vmatpush1.msra.mxu0 0.0
  %1040 = vmatprep.subr.mxu0 0.0
  %1041 = vmatpush1.msra.mxu0 0.0
  %1042 = vmatprep.mubr.f32.mxu0 0.0
  %1043 = vmatmul.mubr.f32.gmra.mrb[0].mxu0 %v902
  %v1044 = vpop.f32.mrb[0].mxu0
  %v1045 = vadd.f32 %v75, %v1044
  %v1046 = vpop.f32.mrb[0].mxu0
  %1047 = vdwg.mxu0
  %v1048 = vadd.f32 %v904, %v974
  %v1049 = vxor.u32 %v1048, 2147483648
  %v1050 = vmul.f32 %v1049, 1.442695
  %v1051 = vpow.pop %v1050
  %v1052 = vadd.f32 %v1051, 1.0
  %v1053 = vrcp.pop %v1052
  %v1054 = vmul.f32 1.0, %v1053
  %v1055 = vadd.f32 %v905, %v976
  %v1056 = vxor.u32 %v1055, 2147483648
  %v1057 = vmul.f32 %v1056, 1.442695
  %v1058 = vpow.pop %v1057
  %v1059 = vadd.f32 %v1058, 1.0
  %v1060 = vrcp.pop %v1059
  %v1061 = vmul.f32 1.0, %v1060
  %v1062 = vmul.f32 %v1054, %v1045
  %v1063 = vadd.f32 %v906, %v1062
  %v1064 = vtanh.pop %v1063
  %v1065 = vsub.f32 %v902, %v1064
  %v1066 = vmul.f32 %v1061, %v1065
  %v1067 = vadd.f32 %v1064, %v1066
  %s1068 = scalar_lea.vmem %s0, 144
  %v1069 = vld [vmem:[%s1068] sm:$0xff]
  %v1070 = vld [vmem:[%s1068 + $0x8] sm:$0xff]
  %v1071 = vld [vmem:[%s1068 + $0x10] sm:$0xff]
  %1072 = vmatprep.subr.mxu0 %v15
  %1073 = vmatpush1.msra.mxu0 %v14
  %1074 = vmatprep.subr.mxu0 %v18
  %1075 = vmatpush1.msra.mxu0 %v17
  %1076 = vmatprep.subr.mxu0 %v21
  %1077 = vmatpush1.msra.mxu0 %v20
  %1078 = vmatprep.subr.mxu0 %v24
  %1079 = vmatpush1.msra.mxu0 %v23
  %1080 = vmatprep.subr.mxu0 %v27
  %1081 = vmatpush1.msra.mxu0 %v26
  %1082 = vmatprep.subr.mxu0 %v30
  %1083 = vmatpush1.msra.mxu0 %v29
  %1084 = vmatprep.subr.mxu0 %v33
  %1085 = vmatpush1.msra.mxu0 %v32
  %1086 = vmatprep.subr.mxu0 %v36
  %1087 = vmatpush1.msra.mxu0 %v35
  %1088 = vmatprep.subr.mxu0 %v39
  %1089 = vmatpush1.msra.mxu0 %v38
  %1090 = vmatprep.subr.mxu0 %v42
  %1091 = vmatpush1.msra.mxu0 %v41
  %1092 = vmatprep.subr.mxu0 %v45
  %1093 = vmatpush1.msra.mxu0 %v44
  %1094 = vmatprep.subr.mxu0 %v48
  %1095 = vmatpush1.msra.mxu0 %v47
  %1096 = vmatprep.subr.mxu0 %v51
  %1097 = vmatpush1.msra.mxu0 %v50
  %1098 = vmatprep.subr.mxu0 %v54
  %1099 = vmatpush1.msra.mxu0 %v53
  %1100 = vmatprep.subr.mxu0 %v57
  %1101 = vmatpush1.msra.mxu0 %v56
  %1102 = vmatprep.subr.mxu0 %v60
  %1103 = vmatpush1.msra.mxu0 %v59
  %1104 = vmatprep.subr.mxu0 0.0
  %1105 = vmatpush1.msra.mxu0 0.0
  %1106 = vmatprep.subr.mxu0 0.0
  %1107 = vmatpush1.msra.mxu0 0.0
  %1108 = vmatprep.subr.mxu0 0.0
  %1109 = vmatpush1.msra.mxu0 0.0
  %1110 = vmatprep.subr.mxu0 0.0
  %1111 = vmatpush1.msra.mxu0 0.0
  %1112 = vmatprep.subr.mxu0 0.0
  %1113 = vmatpush1.msra.mxu0 0.0
  %1114 = vmatprep.subr.mxu0 0.0
  %1115 = vmatpush1.msra.mxu0 0.0
  %1116 = vmatprep.subr.mxu0 0.0
  %1117 = vmatpush1.msra.mxu0 0.0
  %1118 = vmatprep.subr.mxu0 0.0
  %1119 = vmatpush1.msra.mxu0 0.0
  %1120 = vmatprep.subr.mxu0 0.0
  %1121 = vmatpush1.msra.mxu0 0.0
  %1122 = vmatprep.subr.mxu0 0.0
  %1123 = vmatpush1.msra.mxu0 0.0
  %1124 = vmatprep.subr.mxu0 0.0
  %1125 = vmatpush1.msra.mxu0 0.0
  %1126 = vmatprep.subr.mxu0 0.0
  %1127 = vmatpush1.msra.mxu0 0.0
  %1128 = vmatprep.subr.mxu0 0.0
  %1129 = vmatpush1.msra.mxu0 0.0
  %1130 = vmatprep.subr.mxu0 0.0
  %1131 = vmatpush1.msra.mxu0 0.0
  %1132 = vmatprep.subr.mxu0 0.0
  %1133 = vmatpush1.msra.mxu0 0.0
  %1134 = vmatprep.subr.mxu0 0.0
  %1135 = vmatpush1.msra.mxu0 0.0
  %1136 = vmatprep.mubr.f32.mxu0 0.0
  %1137 = vmatmul.mubr.f32.gmra.mrb[0].mxu0 %v1067
  %v1138 = vpop.f32.mrb[0].mxu0
  %v1139 = vadd.f32 %v67, %v1138
  %v1140 = vpop.f32.mrb[0].mxu0
  %v1141 = vadd.f32 %v71, %v1140
  %1142 = vdwg.mxu0
  %1143 = vmatprep.subr.mxu0 0.0
  %1144 = vmatpush1.msra.mxu0 %v16
  %1145 = vmatprep.subr.mxu0 0.0
  %1146 = vmatpush1.msra.mxu0 %v19
  %1147 = vmatprep.subr.mxu0 0.0
  %1148 = vmatpush1.msra.mxu0 %v22
  %1149 = vmatprep.subr.mxu0 0.0
  %1150 = vmatpush1.msra.mxu0 %v25
  %1151 = vmatprep.subr.mxu0 0.0
  %1152 = vmatpush1.msra.mxu0 %v28
  %1153 = vmatprep.subr.mxu0 0.0
  %1154 = vmatpush1.msra.mxu0 %v31
  %1155 = vmatprep.subr.mxu0 0.0
  %1156 = vmatpush1.msra.mxu0 %v34
  %1157 = vmatprep.subr.mxu0 0.0
  %1158 = vmatpush1.msra.mxu0 %v37
  %1159 = vmatprep.subr.mxu0 0.0
  %1160 = vmatpush1.msra.mxu0 %v40
  %1161 = vmatprep.subr.mxu0 0.0
  %1162 = vmatpush1.msra.mxu0 %v43
  %1163 = vmatprep.subr.mxu0 0.0
  %1164 = vmatpush1.msra.mxu0 %v46
  %1165 = vmatprep.subr.mxu0 0.0
  %1166 = vmatpush1.msra.mxu0 %v49
  %1167 = vmatprep.subr.mxu0 0.0
  %1168 = vmatpush1.msra.mxu0 %v52
  %1169 = vmatprep.subr.mxu0 0.0
  %1170 = vmatpush1.msra.mxu0 %v55
  %1171 = vmatprep.subr.mxu0 0.0
  %1172 = vmatpush1.msra.mxu0 %v58
  %1173 = vmatprep.subr.mxu0 0.0
  %1174 = vmatpush1.msra.mxu0 %v61
  %1175 = vmatprep.subr.mxu0 0.0
  %1176 = vmatpush1.msra.mxu0 0.0
  %1177 = vmatprep.subr.mxu0 0.0
  %1178 = vmatpush1.msra.mxu0 0.0
  %1179 = vmatprep.subr.mxu0 0.0
  %1180 = vmatpush1.msra.mxu0 0.0
  %1181 = vmatprep.subr.mxu0 0.0
  %1182 = vmatpush1.msra.mxu0 0.0
  %1183 = vmatprep.subr.mxu0 0.0
  %1184 = vmatpush1.msra.mxu0 0.0
  %1185 = vmatprep.subr.mxu0 0.0
  %1186 = vmatpush1.msra.mxu0 0.0
  %1187 = vmatprep.subr.mxu0 0.0
  %1188 = vmatpush1.msra.mxu0 0.0
  %1189 = vmatprep.subr.mxu0 0.0
  %1190 = vmatpush1.msra.mxu0 0.0
  %1191 = vmatprep.subr.mxu0 0.0
  %1192 = vmatpush1.msra.mxu0 0.0
  %1193 = vmatprep.subr.mxu0 0.0
  %1194 = vmatpush1.msra.mxu0 0.0
  %1195 = vmatprep.subr.mxu0 0.0
  %1196 = vmatpush1.msra.mxu0 0.0
  %1197 = vmatprep.subr.mxu0 0.0
  %1198 = vmatpush1.msra.mxu0 0.0
  %1199 = vmatprep.subr.mxu0 0.0
  %1200 = vmatpush1.msra.mxu0 0.0
  %1201 = vmatprep.subr.mxu0 0.0
  %1202 = vmatpush1.msra.mxu0 0.0
  %1203 = vmatprep.subr.mxu0 0.0
  %1204 = vmatpush1.msra.mxu0 0.0
  %1205 = vmatprep.subr.mxu0 0.0
  %1206 = vmatpush1.msra.mxu0 0.0
  %1207 = vmatprep.mubr.f32.mxu0 0.0
  %1208 = vmatmul.mubr.f32.gmra.mrb[0].mxu0 %v1067
  %v1209 = vpop.f32.mrb[0].mxu0
  %v1210 = vadd.f32 %v75, %v1209
  %v1211 = vpop.f32.mrb[0].mxu0
  %1212 = vdwg.mxu0
  %v1213 = vadd.f32 %v1069, %v1139
  %v1214 = vxor.u32 %v1213, 2147483648
  %v1215 = vmul.f32 %v1214, 1.442695
  %v1216 = vpow.pop %v1215
  %v1217 = vadd.f32 %v1216, 1.0
  %v1218 = vrcp.pop %v1217
  %v1219 = vmul.f32 1.0, %v1218
  %v1220 = vadd.f32 %v1070, %v1141
  %v1221 = vxor.u32 %v1220, 2147483648
  %v1222 = vmul.f32 %v1221, 1.442695
  %v1223 = vpow.pop %v1222
  %v1224 = vadd.f32 %v1223, 1.0
  %v1225 = vrcp.pop %v1224
  %v1226 = vmul.f32 1.0, %v1225
  %v1227 = vmul.f32 %v1219, %v1210
  %v1228 = vadd.f32 %v1071, %v1227
  %v1229 = vtanh.pop %v1228
  %v1230 = vsub.f32 %v1067, %v1229
  %v1231 = vmul.f32 %v1226, %v1230
  %v1232 = vadd.f32 %v1229, %v1231
  %s1233 = scalar_lea.vmem %s0, 168
  %v1234 = vld [vmem:[%s1233] sm:$0xff]
  %v1235 = vld [vmem:[%s1233 + $0x8] sm:$0xff]
  %v1236 = vld [vmem:[%s1233 + $0x10] sm:$0xff]
  %1237 = vmatprep.subr.mxu0 %v15
  %1238 = vmatpush1.msra.mxu0 %v14
  %1239 = vmatprep.subr.mxu0 %v18
  %1240 = vmatpush1.msra.mxu0 %v17
  %1241 = vmatprep.subr.mxu0 %v21
  %1242 = vmatpush1.msra.mxu0 %v20
  %1243 = vmatprep.subr.mxu0 %v24
  %1244 = vmatpush1.msra.mxu0 %v23
  %1245 = vmatprep.subr.mxu0 %v27
  %1246 = vmatpush1.msra.mxu0 %v26
  %1247 = vmatprep.subr.mxu0 %v30
  %1248 = vmatpush1.msra.mxu0 %v29
  %1249 = vmatprep.subr.mxu0 %v33
  %1250 = vmatpush1.msra.mxu0 %v32
  %1251 = vmatprep.subr.mxu0 %v36
  %1252 = vmatpush1.msra.mxu0 %v35
  %1253 = vmatprep.subr.mxu0 %v39
  %1254 = vmatpush1.msra.mxu0 %v38
  %1255 = vmatprep.subr.mxu0 %v42
  %1256 = vmatpush1.msra.mxu0 %v41
  %1257 = vmatprep.subr.mxu0 %v45
  %1258 = vmatpush1.msra.mxu0 %v44
  %1259 = vmatprep.subr.mxu0 %v48
  %1260 = vmatpush1.msra.mxu0 %v47
  %1261 = vmatprep.subr.mxu0 %v51
  %1262 = vmatpush1.msra.mxu0 %v50
  %1263 = vmatprep.subr.mxu0 %v54
  %1264 = vmatpush1.msra.mxu0 %v53
  %1265 = vmatprep.subr.mxu0 %v57
  %1266 = vmatpush1.msra.mxu0 %v56
  %1267 = vmatprep.subr.mxu0 %v60
  %1268 = vmatpush1.msra.mxu0 %v59
  %1269 = vmatprep.subr.mxu0 0.0
  %1270 = vmatpush1.msra.mxu0 0.0
  %1271 = vmatprep.subr.mxu0 0.0
  %1272 = vmatpush1.msra.mxu0 0.0
  %1273 = vmatprep.subr.mxu0 0.0
  %1274 = vmatpush1.msra.mxu0 0.0
  %1275 = vmatprep.subr.mxu0 0.0
  %1276 = vmatpush1.msra.mxu0 0.0
  %1277 = vmatprep.subr.mxu0 0.0
  %1278 = vmatpush1.msra.mxu0 0.0
  %1279 = vmatprep.subr.mxu0 0.0
  %1280 = vmatpush1.msra.mxu0 0.0
  %1281 = vmatprep.subr.mxu0 0.0
  %1282 = vmatpush1.msra.mxu0 0.0
  %1283 = vmatprep.subr.mxu0 0.0
  %1284 = vmatpush1.msra.mxu0 0.0
  %1285 = vmatprep.subr.mxu0 0.0
  %1286 = vmatpush1.msra.mxu0 0.0
  %1287 = vmatprep.subr.mxu0 0.0
  %1288 = vmatpush1.msra.mxu0 0.0
  %1289 = vmatprep.subr.mxu0 0.0
  %1290 = vmatpush1.msra.mxu0 0.0
  %1291 = vmatprep.subr.mxu0 0.0
  %1292 = vmatpush1.msra.mxu0 0.0
  %1293 = vmatprep.subr.mxu0 0.0
  %1294 = vmatpush1.msra.mxu0 0.0
  %1295 = vmatprep.subr.mxu0 0.0
  %1296 = vmatpush1.msra.mxu0 0.0
  %1297 = vmatprep.subr.mxu0 0.0
  %1298 = vmatpush1.msra.mxu0 0.0
  %1299 = vmatprep.subr.mxu0 0.0
  %1300 = vmatpush1.msra.mxu0 0.0
  %1301 = vmatprep.mubr.f32.mxu0 0.0
  %1302 = vmatmul.mubr.f32.gmra.mrb[0].mxu0 %v1232
  %v1303 = vpop.f32.mrb[0].mxu0
  %v1304 = vadd.f32 %v67, %v1303
  %v1305 = vpop.f32.mrb[0].mxu0
  %v1306 = vadd.f32 %v71, %v1305
  %1307 = vdwg.mxu0
  %1308 = vmatprep.subr.mxu0 0.0
  %1309 = vmatpush1.msra.mxu0 %v16
  %1310 = vmatprep.subr.mxu0 0.0
  %1311 = vmatpush1.msra.mxu0 %v19
  %1312 = vmatprep.subr.mxu0 0.0
  %1313 = vmatpush1.msra.mxu0 %v22
  %1314 = vmatprep.subr.mxu0 0.0
  %1315 = vmatpush1.msra.mxu0 %v25
  %1316 = vmatprep.subr.mxu0 0.0
  %1317 = vmatpush1.msra.mxu0 %v28
  %1318 = vmatprep.subr.mxu0 0.0
  %1319 = vmatpush1.msra.mxu0 %v31
  %1320 = vmatprep.subr.mxu0 0.0
  %1321 = vmatpush1.msra.mxu0 %v34
  %1322 = vmatprep.subr.mxu0 0.0
  %1323 = vmatpush1.msra.mxu0 %v37
  %1324 = vmatprep.subr.mxu0 0.0
  %1325 = vmatpush1.msra.mxu0 %v40
  %1326 = vmatprep.subr.mxu0 0.0
  %1327 = vmatpush1.msra.mxu0 %v43
  %1328 = vmatprep.subr.mxu0 0.0
  %1329 = vmatpush1.msra.mxu0 %v46
  %1330 = vmatprep.subr.mxu0 0.0
  %1331 = vmatpush1.msra.mxu0 %v49
  %1332 = vmatprep.subr.mxu0 0.0
  %1333 = vmatpush1.msra.mxu0 %v52
  %1334 = vmatprep.subr.mxu0 0.0
  %1335 = vmatpush1.msra.mxu0 %v55
  %1336 = vmatprep.subr.mxu0 0.0
  %1337 = vmatpush1.msra.mxu0 %v58
  %1338 = vmatprep.subr.mxu0 0.0
  %1339 = vmatpush1.msra.mxu0 %v61
  %1340 = vmatprep.subr.mxu0 0.0
  %1341 = vmatpush1.msra.mxu0 0.0
  %1342 = vmatprep.subr.mxu0 0.0
  %1343 = vmatpush1.msra.mxu0 0.0
  %1344 = vmatprep.subr.mxu0 0.0
  %1345 = vmatpush1.msra.mxu0 0.0
  %1346 = vmatprep.subr.mxu0 0.0
  %1347 = vmatpush1.msra.mxu0 0.0
  %1348 = vmatprep.subr.mxu0 0.0
  %1349 = vmatpush1.msra.mxu0 0.0
  %1350 = vmatprep.subr.mxu0 0.0
  %1351 = vmatpush1.msra.mxu0 0.0
  %1352 = vmatprep.subr.mxu0 0.0
  %1353 = vmatpush1.msra.mxu0 0.0
  %1354 = vmatprep.subr.mxu0 0.0
  %1355 = vmatpush1.msra.mxu0 0.0
  %1356 = vmatprep.subr.mxu0 0.0
  %1357 = vmatpush1.msra.mxu0 0.0
  %1358 = vmatprep.subr.mxu0 0.0
  %1359 = vmatpush1.msra.mxu0 0.0
  %1360 = vmatprep.subr.mxu0 0.0
  %1361 = vmatpush1.msra.mxu0 0.0
  %1362 = vmatprep.subr.mxu0 0.0
  %1363 = vmatpush1.msra.mxu0 0.0
  %1364 = vmatprep.subr.mxu0 0.0
  %1365 = vmatpush1.msra.mxu0 0.0
  %1366 = vmatprep.subr.mxu0 0.0
  %1367 = vmatpush1.msra.mxu0 0.0
  %1368 = vmatprep.subr.mxu0 0.0
  %1369 = vmatpush1.msra.mxu0 0.0
  %1370 = vmatprep.subr.mxu0 0.0
  %1371 = vmatpush1.msra.mxu0 0.0
  %1372 = vmatprep.mubr.f32.mxu0 0.0
  %1373 = vmatmul.mubr.f32.gmra.mrb[0].mxu0 %v1232
  %v1374 = vpop.f32.mrb[0].mxu0
  %v1375 = vadd.f32 %v75, %v1374
  %v1376 = vpop.f32.mrb[0].mxu0
  %1377 = vdwg.mxu0
  %v1378 = vadd.f32 %v1234, %v1304
  %v1379 = vxor.u32 %v1378, 2147483648
  %v1380 = vmul.f32 %v1379, 1.442695
  %v1381 = vpow.pop %v1380
  %v1382 = vadd.f32 %v1381, 1.0
  %v1383 = vrcp.pop %v1382
  %v1384 = vmul.f32 1.0, %v1383
  %v1385 = vadd.f32 %v1235, %v1306
  %v1386 = vxor.u32 %v1385, 2147483648
  %v1387 = vmul.f32 %v1386, 1.442695
  %v1388 = vpow.pop %v1387
  %v1389 = vadd.f32 %v1388, 1.0
  %v1390 = vrcp.pop %v1389
  %v1391 = vmul.f32 1.0, %v1390
  %v1392 = vmul.f32 %v1384, %v1375
  %v1393 = vadd.f32 %v1236, %v1392
  %v1394 = vtanh.pop %v1393
  %v1395 = vsub.f32 %v1232, %v1394
  %v1396 = vmul.f32 %v1391, %v1395
  %v1397 = vadd.f32 %v1394, %v1396
  %1398 = vst [vmem:[%s3] sm:$0xff] %v1397
  // Predicated region
  $region14: #{char_model_forward.1} parent=0 // pred_check
    _
  $region15: #{char_model_forward.1} parent=0 // pred_check_branch
    %1400 = sbr.rel (0) target = $region17
  $region16: #{char_model_forward.1} parent=0 // pred_region
    _
  $region17: #{char_model_forward.1} parent=0 // pred_fallthru
    _
  // Predicated region
  $region18: #{char_model_forward.1} parent=0 // pred_check
    _
  $region19: #{char_model_forward.1} parent=0 // pred_check_branch
    %1402 = sbr.rel (0) target = $region21
  $region20: #{char_model_forward.1} parent=0 // pred_region
    _
  $region21: #{char_model_forward.1} parent=0 // pred_fallthru
    _

</llo_original>
